<compile_context>
chip_gen: v5e
topology: v5e:2x2
jax: 0.10.0
libtpu: 0.0.40
codegen_flags: <defaults>
</compile_context>

<pallas_src>
import functools

import jax
import jax.numpy as jnp
from jax import lax
from jax.experimental import pallas as pl
from jax.experimental.pallas import tpu as pltpu

EPS = 1e-5
NEG_SLOPE = 0.01  # nn.LeakyReLU default negative_slope


def _round_up(v, m=128):
    return (v + m - 1) // m * m


def _residual_kernel(need_skip, N, H, W, Cin, Cmid, Cout, L1, L2,
                     x_ref, w1_ref, w2_ref, ws_ref, par_ref, mask_ref,
                     out_ref, xp_ref, p1_ref, p2_ref):
    """Fused residual block, channel-major / row-wrapped flat-spatial layout.

    x_ref   : (N, Cin, H*Wp)  bf16   width-pre-padded input (Wp = W+4)
    w1_ref  : (Cmid, 9*Cin)   bf16   conv1 weights, col = (dy*3+dx)*Cin + cin
    w2_ref  : (Cout, 9*Cmid)  bf16   conv2 weights
    ws_ref  : (Cout, Cin)     bf16   1x1 skip conv
    par_ref : (Cout, 8)       f32    cols: b1,g1,be1,b2,g2,be2,bs,-
    mask_ref: (2, Lmax)       f32    row0 = BN1 mask (N*L1), row1 = BN2 (N*L2)
    out_ref : (N, Cout, L2)   f32    row-wrapped output
    xp_ref  : (Cin, LX)       bf16   per-sample zero-padded input (scratch)
    p1_ref  : (9*Cin, N*L1)   bf16   conv1 im2col matrix (scratch, batched)
    p2_ref  : (9*Cmid, N*L2)  bf16   conv2 im2col matrix (scratch, batched)
    """
    Wp = W + 4
    H1, W1 = H + 2, W + 2
    taps = [(dy, dx) for dy in range(3) for dx in range(3)]

    # ---- per-channel params: static slices, (C, 1) column vectors ----------
    b1 = par_ref[0:Cmid, 0:1]
    g1 = par_ref[0:Cmid, 1:2]
    be1 = par_ref[0:Cmid, 2:3]
    b2 = par_ref[0:Cout, 3:4]
    g2 = par_ref[0:Cout, 4:5]
    be2 = par_ref[0:Cout, 5:6]
    bs = par_ref[0:Cout, 6:7]

    m1 = mask_ref[0:1, 0:N * L1]          # (1, N*L1)
    m2 = mask_ref[1:2, 0:N * L2]          # (1, N*L2)

    # ---- pass 1: batched im2col for conv1 ----------------------------------
    # top/bottom zero rows + tail come from the memset, width padding comes
    # pre-done from the wrapper; interior is one wide store per sample.
    xp_ref[...] = jnp.zeros(xp_ref.shape, xp_ref.dtype)
    for n in range(N):
        xp_ref[:, 2 * Wp:2 * Wp + H * Wp] = x_ref[n]
        xp = xp_ref[...]                  # (Cin, LX) bf16
        for t, (dy, dx) in enumerate(taps):
            s = dy * Wp + dx
            p1_ref[t * Cin:(t + 1) * Cin, n * L1:n * L1 + L1] = xp[:, s:s + L1]

    p1 = p1_ref[...]                      # (9*Cin, N*L1) bf16
    a1 = jnp.dot(w1_ref[...], p1, preferred_element_type=jnp.float32) + b1

    # ---- bn1: one-pass batched stats (biased variance) ----------------------
    cnt1 = float(N * H1 * W1)
    am1 = a1 * m1
    mu1 = jnp.sum(am1, axis=1, keepdims=True) / cnt1
    var1 = jnp.maximum(jnp.sum(am1 * a1, axis=1, keepdims=True) / cnt1
                       - mu1 * mu1, 0.0)
    sc1 = g1 * lax.rsqrt(var1 + EPS)
    sh1 = be1 - mu1 * sc1
    o1 = (a1 * sc1 + sh1).astype(p2_ref.dtype)   # (Cmid, N*L1) bf16

    # ---- pass 2: batched im2col for conv2 ----------------------------------
    for n in range(N):
        for t, (dy, dx) in enumerate(taps):
            s = dy * Wp + dx
            p2_ref[t * Cmid:(t + 1) * Cmid, n * L2:n * L2 + L2] = \
                o1[:, n * L1 + s:n * L1 + s + L2]

    a2 = jnp.dot(w2_ref[...], p2_ref[...],
                 preferred_element_type=jnp.float32) + b2

    # ---- bn2 + LeakyReLU ----------------------------------------------------
    cnt2 = float(N * H * W)
    am2 = a2 * m2
    mu2 = jnp.sum(am2, axis=1, keepdims=True) / cnt2
    var2 = jnp.maximum(jnp.sum(am2 * a2, axis=1, keepdims=True) / cnt2
                       - mu2 * mu2, 0.0)
    sc2 = g2 * lax.rsqrt(var2 + EPS)
    sh2 = be2 - mu2 * sc2
    o2 = a2 * sc2 + sh2
    o2 = jnp.maximum(o2, NEG_SLOPE * o2)          # LeakyReLU

    # ---- skip path: centre tap (dy=2,dx=2) of conv1's im2col matrix == x ---
    ctr = p1[8 * Cin:9 * Cin, :]                  # (Cin, N*L1) bf16
    if need_skip:
        res = jnp.dot(ws_ref[...], ctr, preferred_element_type=jnp.float32) + bs
    else:
        res = ctr.astype(jnp.float32)             # Cin == Cout in this branch

    # ---- lane-dense (multiple of 128) per-sample output stores --------------
    for n in range(N):
        out_ref[n] = (o2[:, n * L2:(n + 1) * L2]
                      + res[:, n * L1:n * L1 + L2])


def residual_forward(x_nchw, params, inp_dim, out_dim):
    """NCHW in / NCHW out; parameters in PyTorch layout."""
    N, Cin, H, W = x_nchw.shape
    assert Cin == inp_dim
    Cmid, Cout = out_dim // 2, out_dim
    need_skip = inp_dim != out_dim

    Wp = W + 4
    H1, W1 = H + 2, W + 2
    L2 = _round_up(H * Wp)                 # conv2-output flat length (padded)
    L1 = _round_up(2 * Wp + 2 + L2)        # conv1-output flat length
    LX = _round_up(2 * Wp + 2 + L1)        # padded-input flat length

    # width pre-pad (fuses with reshape/cast); row-wrapped flat spatial, bf16.
    xw = jnp.pad(x_nchw.astype(jnp.float32), ((0, 0), (0, 0), (0, 0), (2, 2)))
    x_flat = xw.reshape(N, Cin, H * Wp).astype(jnp.bfloat16)

    # conv weights -> im2col layout (row = out channel, col = tap*Cin + cin)
    w1 = jnp.transpose(params["w1"], (0, 2, 3, 1)).reshape(Cmid, 9 * Cin)
    w2 = jnp.transpose(params["w2"], (0, 2, 3, 1)).reshape(Cout, 9 * Cmid)
    ws = params["ws"].reshape(Cout, Cin)
    w1, w2, ws = (w1.astype(jnp.bfloat16), w2.astype(jnp.bfloat16),
                  ws.astype(jnp.bfloat16))

    # pack the seven per-channel vectors into ONE (Cout, 8) f32 array
    def _padc(v):
        v = v.astype(jnp.float32)
        return jnp.pad(v, (0, Cout - v.shape[0]))
    par = jnp.stack([_padc(params["b1"]), _padc(params["g1"]),
                     _padc(params["be1"]), _padc(params["b2"]),
                     _padc(params["g2"]), _padc(params["be2"]),
                     _padc(params["bs"]), jnp.zeros((Cout,), jnp.float32)],
                    axis=1)                                     # (Cout, 8)

    # BN validity masks for the row-wrapped flat layout, packed into one array
    o1i = jnp.arange(L1)
    m1 = (((o1i % Wp) < W1) & ((o1i // Wp) < H1)).astype(jnp.float32)
    o2i = jnp.arange(L2)
    m2 = (((o2i % Wp) < W) & ((o2i // Wp) < H)).astype(jnp.float32)
    m1b, m2b = jnp.tile(m1, (N,)), jnp.tile(m2, (N,))
    Lmax = max(N * L1, N * L2)
    masks = jnp.stack([jnp.pad(m1b, (0, Lmax - N * L1)),
                       jnp.pad(m2b, (0, Lmax - N * L2))], axis=0)  # (2, Lmax)

    # VMEM budget from the actual footprint, capped by the device capacity
    bf, f4 = 2, 4
    scratch_bytes = bf * (Cin * LX + 9 * Cin * N * L1 + 9 * Cmid * N * L2)
    in_bytes = (bf * (x_flat.size + w1.size + w2.size + ws.size)
                + f4 * (par.size + masks.size))
    out_bytes = f4 * N * Cout * L2
    live_bytes = 2 * f4 * (Cmid * N * L1 + 2 * Cout * N * L2)
    try:
        cap = int(pltpu.get_tpu_info().vmem_capacity_bytes)
    except Exception:
        cap = 64 << 20   # v7x per-TC VMEM
    vmem_limit = int(min(cap, scratch_bytes + in_bytes + out_bytes
                         + live_bytes + (8 << 20)))

    kernel = functools.partial(_residual_kernel, need_skip, N, H, W,
                               Cin, Cmid, Cout, L1, L2)
    vmem = pl.BlockSpec(memory_space=pltpu.MemorySpace.VMEM)

    out_flat = pl.pallas_call(
        kernel,
        out_shape=jax.ShapeDtypeStruct((N, Cout, L2), jnp.float32),
        in_specs=[vmem] * 6,
        out_specs=vmem,
        scratch_shapes=[
            pltpu.VMEM((Cin, LX), jnp.bfloat16),          # padded input
            pltpu.VMEM((9 * Cin, N * L1), jnp.bfloat16),  # conv1 im2col
            pltpu.VMEM((9 * Cmid, N * L2), jnp.bfloat16),  # conv2 im2col
        ],
        compiler_params=pltpu.CompilerParams(vmem_limit_bytes=vmem_limit),
    )(x_flat, w1, w2, ws, par, masks)

    # row-wrapped (width Wp) -> NCHW: drop the pad tail and wrap columns.
    out = out_flat[:, :, :H * Wp].reshape(N, Cout, H, Wp)[:, :, :, :W]
    return out


# ---------------- pure-JAX reference (NCHW, same semantics as PyTorch) ------
def _ref_forward(x, p, inp_dim, out_dim):
    def conv(xx, w, b, pad):
        y = lax.conv_general_dilated(
            xx, w, window_strides=(1, 1),
            padding=[(pad, pad), (pad, pad)],
            dimension_numbers=("NCHW", "OIHW", "NCHW"))
        return y + b.reshape(1, -1, 1, 1)

    def bn(xx, g, be):
        mu = jnp.mean(xx, axis=(0, 2, 3), keepdims=True)
        var = jnp.mean((xx - mu) ** 2, axis=(0, 2, 3), keepdims=True)
        return (xx - mu) * lax.rsqrt(var + EPS) * g.reshape(1, -1, 1, 1) \
            + be.reshape(1, -1, 1, 1)

    residual = conv(x, p["ws"], p["bs"], 0) if inp_dim != out_dim else x
    out = conv(x, p["w1"], p["b1"], 2)
    out = bn(out, p["g1"], p["be1"])
    out = conv(out, p["w2"], p["b2"], 0)
    out = bn(out, p["g2"], p["be2"])
    out = jnp.where(out > 0, out, NEG_SLOPE * out)
    return out + residual


if __name__ == "__main__":
    # Small deterministic setup: Residual(inp_dim=4, out_dim=8), x: (2, 4, 16, 16)
    inp_dim, out_dim = 4, 8
    N, H, W = 2, 16, 16
    Cmid = out_dim // 2

    key = jax.random.PRNGKey(0)
    ks = jax.random.split(key, 12)
    params = {
        "w1": 0.1 * jax.random.normal(ks[0], (Cmid, inp_dim, 3, 3), jnp.float32),
        "b1": 0.1 * jax.random.normal(ks[1], (Cmid,), jnp.float32),
        "g1": 1.0 + 0.1 * jax.random.normal(ks[2], (Cmid,), jnp.float32),
        "be1": 0.1 * jax.random.normal(ks[3], (Cmid,), jnp.float32),
        "w2": 0.1 * jax.random.normal(ks[4], (out_dim, Cmid, 3, 3), jnp.float32),
        "b2": 0.1 * jax.random.normal(ks[5], (out_dim,), jnp.float32),
        "g2": 1.0 + 0.1 * jax.random.normal(ks[6], (out_dim,), jnp.float32),
        "be2": 0.1 * jax.random.normal(ks[7], (out_dim,), jnp.float32),
        "ws": 0.1 * jax.random.normal(ks[8], (out_dim, inp_dim, 1, 1), jnp.float32),
        "bs": 0.1 * jax.random.normal(ks[9], (out_dim,), jnp.float32),
    }
    x = jax.random.normal(ks[10], (N, inp_dim, H, W), jnp.float32)

    out = jax.block_until_ready(residual_forward(x, params, inp_dim, out_dim))
    ref = jax.block_until_ready(_ref_forward(x, params, inp_dim, out_dim))

    assert out.shape == (N, out_dim, H, W), out.shape
    assert jnp.all(jnp.isfinite(out))
    assert jnp.allclose(out, ref, atol=1e-2, rtol=1e-2), float(
        jnp.max(jnp.abs(out - ref)))

    print("KERNEL_OK")
</pallas_src>

<mosaic_0001>
module attributes {stable_mosaic.version = 11 : i64} {
  func.func @_residual_kernel(%arg0: memref<2x4x320xbf16, #tpu.memory_space<vmem>>, %arg1: memref<4x36xbf16, #tpu.memory_space<vmem>>, %arg2: memref<8x36xbf16, #tpu.memory_space<vmem>>, %arg3: memref<8x4xbf16, #tpu.memory_space<vmem>>, %arg4: memref<8x8xf32, #tpu.memory_space<vmem>>, %arg5: memref<2x1024xf32, #tpu.memory_space<vmem>>, %arg6: memref<2x8x384xf32, #tpu.memory_space<vmem>>, %arg7: memref<4x640xbf16, #tpu.memory_space<vmem>>, %arg8: memref<36x1024xbf16, #tpu.memory_space<vmem>>, %arg9: memref<36x768xbf16, #tpu.memory_space<vmem>>) attributes {dimension_semantics = [], scalar_prefetch = 0 : i64, scratch_operands = 3 : i64, tpu.core_type = #tpu.core_type<tc>} {
    %c0 = arith.constant 0 : index
    %c0_0 = arith.constant 0 : index
    %0 = vector.load %arg4[%c0, %c0_0] : memref<8x8xf32, #tpu.memory_space<vmem>>, vector<4x1xf32>
    %c0_1 = arith.constant 0 : index
    %c1 = arith.constant 1 : index
    %1 = vector.load %arg4[%c0_1, %c1] : memref<8x8xf32, #tpu.memory_space<vmem>>, vector<4x1xf32>
    %c0_2 = arith.constant 0 : index
    %c2 = arith.constant 2 : index
    %2 = vector.load %arg4[%c0_2, %c2] : memref<8x8xf32, #tpu.memory_space<vmem>>, vector<4x1xf32>
    %c0_3 = arith.constant 0 : index
    %c3 = arith.constant 3 : index
    %3 = vector.load %arg4[%c0_3, %c3] : memref<8x8xf32, #tpu.memory_space<vmem>>, vector<8x1xf32>
    %c0_4 = arith.constant 0 : index
    %c4 = arith.constant 4 : index
    %4 = vector.load %arg4[%c0_4, %c4] : memref<8x8xf32, #tpu.memory_space<vmem>>, vector<8x1xf32>
    %c0_5 = arith.constant 0 : index
    %c5 = arith.constant 5 : index
    %5 = vector.load %arg4[%c0_5, %c5] : memref<8x8xf32, #tpu.memory_space<vmem>>, vector<8x1xf32>
    %c0_6 = arith.constant 0 : index
    %c6 = arith.constant 6 : index
    %6 = vector.load %arg4[%c0_6, %c6] : memref<8x8xf32, #tpu.memory_space<vmem>>, vector<8x1xf32>
    %c0_7 = arith.constant 0 : index
    %c0_8 = arith.constant 0 : index
    %7 = vector.load %arg5[%c0_7, %c0_8] : memref<2x1024xf32, #tpu.memory_space<vmem>>, vector<1x1024xf32>
    %c1_9 = arith.constant 1 : index
    %c0_10 = arith.constant 0 : index
    %8 = vector.load %arg5[%c1_9, %c0_10] : memref<2x1024xf32, #tpu.memory_space<vmem>>, vector<1x768xf32>
    %cst = arith.constant 0.000000e+00 : bf16
    %9 = vector.broadcast %cst : bf16 to vector<4x640xbf16>
    %c0_11 = arith.constant 0 : index
    %c0_12 = arith.constant 0 : index
    %10 = vector.load %arg7[%c0_11, %c0_12] : memref<4x640xbf16, #tpu.memory_space<vmem>>, vector<4x640xbf16>
    tpu.vector_store %arg7[%c0_11, %c0_12], %9 {strides = array<i32>} : memref<4x640xbf16, #tpu.memory_space<vmem>>, vector<4x640xbf16>,
    %c0_13 = arith.constant 0 : index
    %c0_14 = arith.constant 0 : index
    %c0_15 = arith.constant 0 : index
    %11 = vector.load %arg0[%c0_13, %c0_14, %c0_15] : memref<2x4x320xbf16, #tpu.memory_space<vmem>>, vector<1x4x320xbf16>
    %12 = vector.shape_cast %11 : vector<1x4x320xbf16> to vector<4x320xbf16>
    %c0_16 = arith.constant 0 : index
    %c40 = arith.constant 40 : index
    %13 = vector.load %arg7[%c0_16, %c40] : memref<4x640xbf16, #tpu.memory_space<vmem>>, vector<4x320xbf16>
    tpu.vector_store %arg7[%c0_16, %c40], %12 {strides = array<i32>} : memref<4x640xbf16, #tpu.memory_space<vmem>>, vector<4x320xbf16>,
    %c0_17 = arith.constant 0 : index
    %c0_18 = arith.constant 0 : index
    %14 = vector.load %arg7[%c0_17, %c0_18] : memref<4x640xbf16, #tpu.memory_space<vmem>>, vector<4x640xbf16>
    %15 = vector.extract_strided_slice %14 {offsets = [0, 0], sizes = [4, 512], strides = [1, 1]} : vector<4x640xbf16> to vector<4x512xbf16>
    %c0_19 = arith.constant 0 : index
    %c0_20 = arith.constant 0 : index
    %16 = vector.load %arg8[%c0_19, %c0_20] : memref<36x1024xbf16, #tpu.memory_space<vmem>>, vector<4x512xbf16>
    tpu.vector_store %arg8[%c0_19, %c0_20], %15 {strides = array<i32>} : memref<36x1024xbf16, #tpu.memory_space<vmem>>, vector<4x512xbf16>,
    %17 = vector.extract_strided_slice %14 {offsets = [0, 1], sizes = [4, 512], strides = [1, 1]} : vector<4x640xbf16> to vector<4x512xbf16>
    %c4_21 = arith.constant 4 : index
    %c0_22 = arith.constant 0 : index
    %18 = vector.load %arg8[%c4_21, %c0_22] : memref<36x1024xbf16, #tpu.memory_space<vmem>>, vector<4x512xbf16>
    tpu.vector_store %arg8[%c4_21, %c0_22], %17 {strides = array<i32>} : memref<36x1024xbf16, #tpu.memory_space<vmem>>, vector<4x512xbf16>,
    %19 = vector.extract_strided_slice %14 {offsets = [0, 2], sizes = [4, 512], strides = [1, 1]} : vector<4x640xbf16> to vector<4x512xbf16>
    %c8 = arith.constant 8 : index
    %c0_23 = arith.constant 0 : index
    %20 = vector.load %arg8[%c8, %c0_23] : memref<36x1024xbf16, #tpu.memory_space<vmem>>, vector<4x512xbf16>
    tpu.vector_store %arg8[%c8, %c0_23], %19 {strides = array<i32>} : memref<36x1024xbf16, #tpu.memory_space<vmem>>, vector<4x512xbf16>,
    %21 = vector.extract_strided_slice %14 {offsets = [0, 20], sizes = [4, 512], strides = [1, 1]} : vector<4x640xbf16> to vector<4x512xbf16>
    %c12 = arith.constant 12 : index
    %c0_24 = arith.constant 0 : index
    %22 = vector.load %arg8[%c12, %c0_24] : memref<36x1024xbf16, #tpu.memory_space<vmem>>, vector<4x512xbf16>
    tpu.vector_store %arg8[%c12, %c0_24], %21 {strides = array<i32>} : memref<36x1024xbf16, #tpu.memory_space<vmem>>, vector<4x512xbf16>,
    %23 = vector.extract_strided_slice %14 {offsets = [0, 21], sizes = [4, 512], strides = [1, 1]} : vector<4x640xbf16> to vector<4x512xbf16>
    %c16 = arith.constant 16 : index
    %c0_25 = arith.constant 0 : index
    %24 = vector.load %arg8[%c16, %c0_25] : memref<36x1024xbf16, #tpu.memory_space<vmem>>, vector<4x512xbf16>
    tpu.vector_store %arg8[%c16, %c0_25], %23 {strides = array<i32>} : memref<36x1024xbf16, #tpu.memory_space<vmem>>, vector<4x512xbf16>,
    %25 = vector.extract_strided_slice %14 {offsets = [0, 22], sizes = [4, 512], strides = [1, 1]} : vector<4x640xbf16> to vector<4x512xbf16>
    %c20 = arith.constant 20 : index
    %c0_26 = arith.constant 0 : index
    %26 = vector.load %arg8[%c20, %c0_26] : memref<36x1024xbf16, #tpu.memory_space<vmem>>, vector<4x512xbf16>
    tpu.vector_store %arg8[%c20, %c0_26], %25 {strides = array<i32>} : memref<36x1024xbf16, #tpu.memory_space<vmem>>, vector<4x512xbf16>,
    %27 = vector.extract_strided_slice %14 {offsets = [0, 40], sizes = [4, 512], strides = [1, 1]} : vector<4x640xbf16> to vector<4x512xbf16>
    %c24 = arith.constant 24 : index
    %c0_27 = arith.constant 0 : index
    %28 = vector.load %arg8[%c24, %c0_27] : memref<36x1024xbf16, #tpu.memory_space<vmem>>, vector<4x512xbf16>
    tpu.vector_store %arg8[%c24, %c0_27], %27 {strides = array<i32>} : memref<36x1024xbf16, #tpu.memory_space<vmem>>, vector<4x512xbf16>,
    %29 = vector.extract_strided_slice %14 {offsets = [0, 41], sizes = [4, 512], strides = [1, 1]} : vector<4x640xbf16> to vector<4x512xbf16>
    %c28 = arith.constant 28 : index
    %c0_28 = arith.constant 0 : index
    %30 = vector.load %arg8[%c28, %c0_28] : memref<36x1024xbf16, #tpu.memory_space<vmem>>, vector<4x512xbf16>
    tpu.vector_store %arg8[%c28, %c0_28], %29 {strides = array<i32>} : memref<36x1024xbf16, #tpu.memory_space<vmem>>, vector<4x512xbf16>,
    %31 = vector.extract_strided_slice %14 {offsets = [0, 42], sizes = [4, 512], strides = [1, 1]} : vector<4x640xbf16> to vector<4x512xbf16>
    %c32 = arith.constant 32 : index
    %c0_29 = arith.constant 0 : index
    %32 = vector.load %arg8[%c32, %c0_29] : memref<36x1024xbf16, #tpu.memory_space<vmem>>, vector<4x512xbf16>
    tpu.vector_store %arg8[%c32, %c0_29], %31 {strides = array<i32>} : memref<36x1024xbf16, #tpu.memory_space<vmem>>, vector<4x512xbf16>,
    %c1_30 = arith.constant 1 : index
    %c0_31 = arith.constant 0 : index
    %c0_32 = arith.constant 0 : index
    %33 = vector.load %arg0[%c1_30, %c0_31, %c0_32] : memref<2x4x320xbf16, #tpu.memory_space<vmem>>, vector<1x4x320xbf16>
    %34 = vector.shape_cast %33 : vector<1x4x320xbf16> to vector<4x320xbf16>
    %c0_33 = arith.constant 0 : index
    %c40_34 = arith.constant 40 : index
    %35 = vector.load %arg7[%c0_33, %c40_34] : memref<4x640xbf16, #tpu.memory_space<vmem>>, vector<4x320xbf16>
    tpu.vector_store %arg7[%c0_33, %c40_34], %34 {strides = array<i32>} : memref<4x640xbf16, #tpu.memory_space<vmem>>, vector<4x320xbf16>,
    %c0_35 = arith.constant 0 : index
    %c0_36 = arith.constant 0 : index
    %36 = vector.load %arg7[%c0_35, %c0_36] : memref<4x640xbf16, #tpu.memory_space<vmem>>, vector<4x640xbf16>
    %37 = vector.extract_strided_slice %36 {offsets = [0, 0], sizes = [4, 512], strides = [1, 1]} : vector<4x640xbf16> to vector<4x512xbf16>
    %c0_37 = arith.constant 0 : index
    %c512 = arith.constant 512 : index
    %38 = vector.load %arg8[%c0_37, %c512] : memref<36x1024xbf16, #tpu.memory_space<vmem>>, vector<4x512xbf16>
    tpu.vector_store %arg8[%c0_37, %c512], %37 {strides = array<i32>} : memref<36x1024xbf16, #tpu.memory_space<vmem>>, vector<4x512xbf16>,
    %39 = vector.extract_strided_slice %36 {offsets = [0, 1], sizes = [4, 512], strides = [1, 1]} : vector<4x640xbf16> to vector<4x512xbf16>
    %c4_38 = arith.constant 4 : index
    %c512_39 = arith.constant 512 : index
    %40 = vector.load %arg8[%c4_38, %c512_39] : memref<36x1024xbf16, #tpu.memory_space<vmem>>, vector<4x512xbf16>
    tpu.vector_store %arg8[%c4_38, %c512_39], %39 {strides = array<i32>} : memref<36x1024xbf16, #tpu.memory_space<vmem>>, vector<4x512xbf16>,
    %41 = vector.extract_strided_slice %36 {offsets = [0, 2], sizes = [4, 512], strides = [1, 1]} : vector<4x640xbf16> to vector<4x512xbf16>
    %c8_40 = arith.constant 8 : index
    %c512_41 = arith.constant 512 : index
    %42 = vector.load %arg8[%c8_40, %c512_41] : memref<36x1024xbf16, #tpu.memory_space<vmem>>, vector<4x512xbf16>
    tpu.vector_store %arg8[%c8_40, %c512_41], %41 {strides = array<i32>} : memref<36x1024xbf16, #tpu.memory_space<vmem>>, vector<4x512xbf16>,
    %43 = vector.extract_strided_slice %36 {offsets = [0, 20], sizes = [4, 512], strides = [1, 1]} : vector<4x640xbf16> to vector<4x512xbf16>
    %c12_42 = arith.constant 12 : index
    %c512_43 = arith.constant 512 : index
    %44 = vector.load %arg8[%c12_42, %c512_43] : memref<36x1024xbf16, #tpu.memory_space<vmem>>, vector<4x512xbf16>
    tpu.vector_store %arg8[%c12_42, %c512_43], %43 {strides = array<i32>} : memref<36x1024xbf16, #tpu.memory_space<vmem>>, vector<4x512xbf16>,
    %45 = vector.extract_strided_slice %36 {offsets = [0, 21], sizes = [4, 512], strides = [1, 1]} : vector<4x640xbf16> to vector<4x512xbf16>
    %c16_44 = arith.constant 16 : index
    %c512_45 = arith.constant 512 : index
    %46 = vector.load %arg8[%c16_44, %c512_45] : memref<36x1024xbf16, #tpu.memory_space<vmem>>, vector<4x512xbf16>
    tpu.vector_store %arg8[%c16_44, %c512_45], %45 {strides = array<i32>} : memref<36x1024xbf16, #tpu.memory_space<vmem>>, vector<4x512xbf16>,
    %47 = vector.extract_strided_slice %36 {offsets = [0, 22], sizes = [4, 512], strides = [1, 1]} : vector<4x640xbf16> to vector<4x512xbf16>
    %c20_46 = arith.constant 20 : index
    %c512_47 = arith.constant 512 : index
    %48 = vector.load %arg8[%c20_46, %c512_47] : memref<36x1024xbf16, #tpu.memory_space<vmem>>, vector<4x512xbf16>
    tpu.vector_store %arg8[%c20_46, %c512_47], %47 {strides = array<i32>} : memref<36x1024xbf16, #tpu.memory_space<vmem>>, vector<4x512xbf16>,
    %49 = vector.extract_strided_slice %36 {offsets = [0, 40], sizes = [4, 512], strides = [1, 1]} : vector<4x640xbf16> to vector<4x512xbf16>
    %c24_48 = arith.constant 24 : index
    %c512_49 = arith.constant 512 : index
    %50 = vector.load %arg8[%c24_48, %c512_49] : memref<36x1024xbf16, #tpu.memory_space<vmem>>, vector<4x512xbf16>
    tpu.vector_store %arg8[%c24_48, %c512_49], %49 {strides = array<i32>} : memref<36x1024xbf16, #tpu.memory_space<vmem>>, vector<4x512xbf16>,
    %51 = vector.extract_strided_slice %36 {offsets = [0, 41], sizes = [4, 512], strides = [1, 1]} : vector<4x640xbf16> to vector<4x512xbf16>
    %c28_50 = arith.constant 28 : index
    %c512_51 = arith.constant 512 : index
    %52 = vector.load %arg8[%c28_50, %c512_51] : memref<36x1024xbf16, #tpu.memory_space<vmem>>, vector<4x512xbf16>
    tpu.vector_store %arg8[%c28_50, %c512_51], %51 {strides = array<i32>} : memref<36x1024xbf16, #tpu.memory_space<vmem>>, vector<4x512xbf16>,
    %53 = vector.extract_strided_slice %36 {offsets = [0, 42], sizes = [4, 512], strides = [1, 1]} : vector<4x640xbf16> to vector<4x512xbf16>
    %c32_52 = arith.constant 32 : index
    %c512_53 = arith.constant 512 : index
    %54 = vector.load %arg8[%c32_52, %c512_53] : memref<36x1024xbf16, #tpu.memory_space<vmem>>, vector<4x512xbf16>
    tpu.vector_store %arg8[%c32_52, %c512_53], %53 {strides = array<i32>} : memref<36x1024xbf16, #tpu.memory_space<vmem>>, vector<4x512xbf16>,
    %c0_54 = arith.constant 0 : index
    %c0_55 = arith.constant 0 : index
    %55 = vector.load %arg8[%c0_54, %c0_55] : memref<36x1024xbf16, #tpu.memory_space<vmem>>, vector<36x1024xbf16>
    %c0_56 = arith.constant 0 : index
    %c0_57 = arith.constant 0 : index
    %56 = vector.load %arg1[%c0_56, %c0_57] : memref<4x36xbf16, #tpu.memory_space<vmem>>, vector<4x36xbf16>
    %cst_58 = arith.constant dense<0.000000e+00> : vector<4x1024xf32>
    %57 = tpu.matmul %56, %55, %cst_58 {dimension_numbers = #tpu.dot_dimension_numbers<[1], [0], [0], [1], [0, 0, 1, 1], [], []>} : vector<4x36xbf16>, vector<36x1024xbf16>, vector<4x1024xf32> -> vector<4x1024xf32>
    %58 = vector.broadcast %0 : vector<4x1xf32> to vector<4x1024xf32>
    %59 = arith.addf %57, %58 : vector<4x1024xf32>
    %60 = vector.broadcast %7 : vector<1x1024xf32> to vector<4x1024xf32>
    %61 = arith.mulf %59, %60 : vector<4x1024xf32>
    %cst_59 = arith.constant dense<0.000000e+00> : vector<4xf32>
    %62 = vector.multi_reduction <add>, %61, %cst_59 [1] : vector<4x1024xf32> to vector<4xf32>
    %63 = vector.shape_cast %62 : vector<4xf32> to vector<4x1xf32>
    %cst_60 = arith.constant 6.480000e+02 : f32
    %64 = vector.broadcast %cst_60 : f32 to vector<4x1xf32>
    %65 = arith.divf %63, %64 : vector<4x1xf32>
    %66 = arith.mulf %61, %59 : vector<4x1024xf32>
    %cst_61 = arith.constant dense<0.000000e+00> : vector<4xf32>
    %67 = vector.multi_reduction <add>, %66, %cst_61 [1] : vector<4x1024xf32> to vector<4xf32>
    %68 = vector.shape_cast %67 : vector<4xf32> to vector<4x1xf32>
    %cst_62 = arith.constant 6.480000e+02 : f32
    %69 = vector.broadcast %cst_62 : f32 to vector<4x1xf32>
    %70 = arith.divf %68, %69 : vector<4x1xf32>
    %71 = arith.mulf %65, %65 : vector<4x1xf32>
    %72 = arith.subf %70, %71 : vector<4x1xf32>
    %cst_63 = arith.constant 0.000000e+00 : f32
    %73 = vector.broadcast %cst_63 : f32 to vector<4x1xf32>
    %74 = arith.maximumf %72, %73 : vector<4x1xf32>
    %cst_64 = arith.constant 9.99999974E-6 : f32
    %75 = vector.broadcast %cst_64 : f32 to vector<4x1xf32>
    %76 = arith.addf %74, %75 : vector<4x1xf32>
    %77 = math.rsqrt %76 : vector<4x1xf32>
    %78 = arith.mulf %1, %77 : vector<4x1xf32>
    %79 = arith.mulf %65, %78 : vector<4x1xf32>
    %80 = arith.subf %2, %79 : vector<4x1xf32>
    %81 = vector.broadcast %78 : vector<4x1xf32> to vector<4x1024xf32>
    %82 = arith.mulf %59, %81 : vector<4x1024xf32>
    %83 = vector.broadcast %80 : vector<4x1xf32> to vector<4x1024xf32>
    %84 = arith.addf %82, %83 : vector<4x1024xf32>
    %85 = arith.truncf %84 : vector<4x1024xf32> to vector<4x1024xbf16>
    %86 = vector.extract_strided_slice %85 {offsets = [0, 0], sizes = [4, 384], strides = [1, 1]} : vector<4x1024xbf16> to vector<4x384xbf16>
    %c0_65 = arith.constant 0 : index
    %c0_66 = arith.constant 0 : index
    %87 = vector.load %arg9[%c0_65, %c0_66] : memref<36x768xbf16, #tpu.memory_space<vmem>>, vector<4x384xbf16>
    tpu.vector_store %arg9[%c0_65, %c0_66], %86 {strides = array<i32>} : memref<36x768xbf16, #tpu.memory_space<vmem>>, vector<4x384xbf16>,
    %88 = vector.extract_strided_slice %85 {offsets = [0, 1], sizes = [4, 384], strides = [1, 1]} : vector<4x1024xbf16> to vector<4x384xbf16>
    %c4_67 = arith.constant 4 : index
    %c0_68 = arith.constant 0 : index
    %89 = vector.load %arg9[%c4_67, %c0_68] : memref<36x768xbf16, #tpu.memory_space<vmem>>, vector<4x384xbf16>
    tpu.vector_store %arg9[%c4_67, %c0_68], %88 {strides = array<i32>} : memref<36x768xbf16, #tpu.memory_space<vmem>>, vector<4x384xbf16>,
    %90 = vector.extract_strided_slice %85 {offsets = [0, 2], sizes = [4, 384], strides = [1, 1]} : vector<4x1024xbf16> to vector<4x384xbf16>
    %c8_69 = arith.constant 8 : index
    %c0_70 = arith.constant 0 : index
    %91 = vector.load %arg9[%c8_69, %c0_70] : memref<36x768xbf16, #tpu.memory_space<vmem>>, vector<4x384xbf16>
    tpu.vector_store %arg9[%c8_69, %c0_70], %90 {strides = array<i32>} : memref<36x768xbf16, #tpu.memory_space<vmem>>, vector<4x384xbf16>,
    %92 = vector.extract_strided_slice %85 {offsets = [0, 20], sizes = [4, 384], strides = [1, 1]} : vector<4x1024xbf16> to vector<4x384xbf16>
    %c12_71 = arith.constant 12 : index
    %c0_72 = arith.constant 0 : index
    %93 = vector.load %arg9[%c12_71, %c0_72] : memref<36x768xbf16, #tpu.memory_space<vmem>>, vector<4x384xbf16>
    tpu.vector_store %arg9[%c12_71, %c0_72], %92 {strides = array<i32>} : memref<36x768xbf16, #tpu.memory_space<vmem>>, vector<4x384xbf16>,
    %94 = vector.extract_strided_slice %85 {offsets = [0, 21], sizes = [4, 384], strides = [1, 1]} : vector<4x1024xbf16> to vector<4x384xbf16>
    %c16_73 = arith.constant 16 : index
    %c0_74 = arith.constant 0 : index
    %95 = vector.load %arg9[%c16_73, %c0_74] : memref<36x768xbf16, #tpu.memory_space<vmem>>, vector<4x384xbf16>
    tpu.vector_store %arg9[%c16_73, %c0_74], %94 {strides = array<i32>} : memref<36x768xbf16, #tpu.memory_space<vmem>>, vector<4x384xbf16>,
    %96 = vector.extract_strided_slice %85 {offsets = [0, 22], sizes = [4, 384], strides = [1, 1]} : vector<4x1024xbf16> to vector<4x384xbf16>
    %c20_75 = arith.constant 20 : index
    %c0_76 = arith.constant 0 : index
    %97 = vector.load %arg9[%c20_75, %c0_76] : memref<36x768xbf16, #tpu.memory_space<vmem>>, vector<4x384xbf16>
    tpu.vector_store %arg9[%c20_75, %c0_76], %96 {strides = array<i32>} : memref<36x768xbf16, #tpu.memory_space<vmem>>, vector<4x384xbf16>,
    %98 = vector.extract_strided_slice %85 {offsets = [0, 40], sizes = [4, 384], strides = [1, 1]} : vector<4x1024xbf16> to vector<4x384xbf16>
    %c24_77 = arith.constant 24 : index
    %c0_78 = arith.constant 0 : index
    %99 = vector.load %arg9[%c24_77, %c0_78] : memref<36x768xbf16, #tpu.memory_space<vmem>>, vector<4x384xbf16>
    tpu.vector_store %arg9[%c24_77, %c0_78], %98 {strides = array<i32>} : memref<36x768xbf16, #tpu.memory_space<vmem>>, vector<4x384xbf16>,
    %100 = vector.extract_strided_slice %85 {offsets = [0, 41], sizes = [4, 384], strides = [1, 1]} : vector<4x1024xbf16> to vector<4x384xbf16>
    %c28_79 = arith.constant 28 : index
    %c0_80 = arith.constant 0 : index
    %101 = vector.load %arg9[%c28_79, %c0_80] : memref<36x768xbf16, #tpu.memory_space<vmem>>, vector<4x384xbf16>
    tpu.vector_store %arg9[%c28_79, %c0_80], %100 {strides = array<i32>} : memref<36x768xbf16, #tpu.memory_space<vmem>>, vector<4x384xbf16>,
    %102 = vector.extract_strided_slice %85 {offsets = [0, 42], sizes = [4, 384], strides = [1, 1]} : vector<4x1024xbf16> to vector<4x384xbf16>
    %c32_81 = arith.constant 32 : index
    %c0_82 = arith.constant 0 : index
    %103 = vector.load %arg9[%c32_81, %c0_82] : memref<36x768xbf16, #tpu.memory_space<vmem>>, vector<4x384xbf16>
    tpu.vector_store %arg9[%c32_81, %c0_82], %102 {strides = array<i32>} : memref<36x768xbf16, #tpu.memory_space<vmem>>, vector<4x384xbf16>,
    %104 = vector.extract_strided_slice %85 {offsets = [0, 512], sizes = [4, 384], strides = [1, 1]} : vector<4x1024xbf16> to vector<4x384xbf16>
    %c0_83 = arith.constant 0 : index
    %c384 = arith.constant 384 : index
    %105 = vector.load %arg9[%c0_83, %c384] : memref<36x768xbf16, #tpu.memory_space<vmem>>, vector<4x384xbf16>
    tpu.vector_store %arg9[%c0_83, %c384], %104 {strides = array<i32>} : memref<36x768xbf16, #tpu.memory_space<vmem>>, vector<4x384xbf16>,
    %106 = vector.extract_strided_slice %85 {offsets = [0, 513], sizes = [4, 384], strides = [1, 1]} : vector<4x1024xbf16> to vector<4x384xbf16>
    %c4_84 = arith.constant 4 : index
    %c384_85 = arith.constant 384 : index
    %107 = vector.load %arg9[%c4_84, %c384_85] : memref<36x768xbf16, #tpu.memory_space<vmem>>, vector<4x384xbf16>
    tpu.vector_store %arg9[%c4_84, %c384_85], %106 {strides = array<i32>} : memref<36x768xbf16, #tpu.memory_space<vmem>>, vector<4x384xbf16>,
    %108 = vector.extract_strided_slice %85 {offsets = [0, 514], sizes = [4, 384], strides = [1, 1]} : vector<4x1024xbf16> to vector<4x384xbf16>
    %c8_86 = arith.constant 8 : index
    %c384_87 = arith.constant 384 : index
    %109 = vector.load %arg9[%c8_86, %c384_87] : memref<36x768xbf16, #tpu.memory_space<vmem>>, vector<4x384xbf16>
    tpu.vector_store %arg9[%c8_86, %c384_87], %108 {strides = array<i32>} : memref<36x768xbf16, #tpu.memory_space<vmem>>, vector<4x384xbf16>,
    %110 = vector.extract_strided_slice %85 {offsets = [0, 532], sizes = [4, 384], strides = [1, 1]} : vector<4x1024xbf16> to vector<4x384xbf16>
    %c12_88 = arith.constant 12 : index
    %c384_89 = arith.constant 384 : index
    %111 = vector.load %arg9[%c12_88, %c384_89] : memref<36x768xbf16, #tpu.memory_space<vmem>>, vector<4x384xbf16>
    tpu.vector_store %arg9[%c12_88, %c384_89], %110 {strides = array<i32>} : memref<36x768xbf16, #tpu.memory_space<vmem>>, vector<4x384xbf16>,
    %112 = vector.extract_strided_slice %85 {offsets = [0, 533], sizes = [4, 384], strides = [1, 1]} : vector<4x1024xbf16> to vector<4x384xbf16>
    %c16_90 = arith.constant 16 : index
    %c384_91 = arith.constant 384 : index
    %113 = vector.load %arg9[%c16_90, %c384_91] : memref<36x768xbf16, #tpu.memory_space<vmem>>, vector<4x384xbf16>
    tpu.vector_store %arg9[%c16_90, %c384_91], %112 {strides = array<i32>} : memref<36x768xbf16, #tpu.memory_space<vmem>>, vector<4x384xbf16>,
    %114 = vector.extract_strided_slice %85 {offsets = [0, 534], sizes = [4, 384], strides = [1, 1]} : vector<4x1024xbf16> to vector<4x384xbf16>
    %c20_92 = arith.constant 20 : index
    %c384_93 = arith.constant 384 : index
    %115 = vector.load %arg9[%c20_92, %c384_93] : memref<36x768xbf16, #tpu.memory_space<vmem>>, vector<4x384xbf16>
    tpu.vector_store %arg9[%c20_92, %c384_93], %114 {strides = array<i32>} : memref<36x768xbf16, #tpu.memory_space<vmem>>, vector<4x384xbf16>,
    %116 = vector.extract_strided_slice %85 {offsets = [0, 552], sizes = [4, 384], strides = [1, 1]} : vector<4x1024xbf16> to vector<4x384xbf16>
    %c24_94 = arith.constant 24 : index
    %c384_95 = arith.constant 384 : index
    %117 = vector.load %arg9[%c24_94, %c384_95] : memref<36x768xbf16, #tpu.memory_space<vmem>>, vector<4x384xbf16>
    tpu.vector_store %arg9[%c24_94, %c384_95], %116 {strides = array<i32>} : memref<36x768xbf16, #tpu.memory_space<vmem>>, vector<4x384xbf16>,
    %118 = vector.extract_strided_slice %85 {offsets = [0, 553], sizes = [4, 384], strides = [1, 1]} : vector<4x1024xbf16> to vector<4x384xbf16>
    %c28_96 = arith.constant 28 : index
    %c384_97 = arith.constant 384 : index
    %119 = vector.load %arg9[%c28_96, %c384_97] : memref<36x768xbf16, #tpu.memory_space<vmem>>, vector<4x384xbf16>
    tpu.vector_store %arg9[%c28_96, %c384_97], %118 {strides = array<i32>} : memref<36x768xbf16, #tpu.memory_space<vmem>>, vector<4x384xbf16>,
    %120 = vector.extract_strided_slice %85 {offsets = [0, 554], sizes = [4, 384], strides = [1, 1]} : vector<4x1024xbf16> to vector<4x384xbf16>
    %c32_98 = arith.constant 32 : index
    %c384_99 = arith.constant 384 : index
    %121 = vector.load %arg9[%c32_98, %c384_99] : memref<36x768xbf16, #tpu.memory_space<vmem>>, vector<4x384xbf16>
    tpu.vector_store %arg9[%c32_98, %c384_99], %120 {strides = array<i32>} : memref<36x768xbf16, #tpu.memory_space<vmem>>, vector<4x384xbf16>,
    %c0_100 = arith.constant 0 : index
    %c0_101 = arith.constant 0 : index
    %122 = vector.load %arg2[%c0_100, %c0_101] : memref<8x36xbf16, #tpu.memory_space<vmem>>, vector<8x36xbf16>
    %c0_102 = arith.constant 0 : index
    %c0_103 = arith.constant 0 : index
    %123 = vector.load %arg9[%c0_102, %c0_103] : memref<36x768xbf16, #tpu.memory_space<vmem>>, vector<36x768xbf16>
    %cst_104 = arith.constant dense<0.000000e+00> : vector<8x768xf32>
    %124 = tpu.matmul %122, %123, %cst_104 {dimension_numbers = #tpu.dot_dimension_numbers<[1], [0], [0], [1], [0, 0, 1, 1], [], []>} : vector<8x36xbf16>, vector<36x768xbf16>, vector<8x768xf32> -> vector<8x768xf32>
    %125 = vector.broadcast %3 : vector<8x1xf32> to vector<8x768xf32>
    %126 = arith.addf %124, %125 : vector<8x768xf32>
    %127 = vector.broadcast %8 : vector<1x768xf32> to vector<8x768xf32>
    %128 = arith.mulf %126, %127 : vector<8x768xf32>
    %cst_105 = arith.constant dense<0.000000e+00> : vector<8xf32>
    %129 = vector.multi_reduction <add>, %128, %cst_105 [1] : vector<8x768xf32> to vector<8xf32>
    %130 = vector.shape_cast %129 : vector<8xf32> to vector<8x1xf32>
    %cst_106 = arith.constant 5.120000e+02 : f32
    %131 = vector.broadcast %cst_106 : f32 to vector<8x1xf32>
    %132 = arith.divf %130, %131 : vector<8x1xf32>
    %133 = arith.mulf %128, %126 : vector<8x768xf32>
    %cst_107 = arith.constant dense<0.000000e+00> : vector<8xf32>
    %134 = vector.multi_reduction <add>, %133, %cst_107 [1] : vector<8x768xf32> to vector<8xf32>
    %135 = vector.shape_cast %134 : vector<8xf32> to vector<8x1xf32>
    %cst_108 = arith.constant 5.120000e+02 : f32
    %136 = vector.broadcast %cst_108 : f32 to vector<8x1xf32>
    %137 = arith.divf %135, %136 : vector<8x1xf32>
    %138 = arith.mulf %132, %132 : vector<8x1xf32>
    %139 = arith.subf %137, %138 : vector<8x1xf32>
    %cst_109 = arith.constant 0.000000e+00 : f32
    %140 = vector.broadcast %cst_109 : f32 to vector<8x1xf32>
    %141 = arith.maximumf %139, %140 : vector<8x1xf32>
    %cst_110 = arith.constant 9.99999974E-6 : f32
    %142 = vector.broadcast %cst_110 : f32 to vector<8x1xf32>
    %143 = arith.addf %141, %142 : vector<8x1xf32>
    %144 = math.rsqrt %143 : vector<8x1xf32>
    %145 = arith.mulf %4, %144 : vector<8x1xf32>
    %146 = arith.mulf %132, %145 : vector<8x1xf32>
    %147 = arith.subf %5, %146 : vector<8x1xf32>
    %148 = vector.broadcast %145 : vector<8x1xf32> to vector<8x768xf32>
    %149 = arith.mulf %126, %148 : vector<8x768xf32>
    %150 = vector.broadcast %147 : vector<8x1xf32> to vector<8x768xf32>
    %151 = arith.addf %149, %150 : vector<8x768xf32>
    %cst_111 = arith.constant 0.00999999977 : f32
    %152 = vector.broadcast %cst_111 : f32 to vector<8x768xf32>
    %153 = arith.mulf %152, %151 : vector<8x768xf32>
    %154 = arith.maximumf %151, %153 : vector<8x768xf32>
    %155 = vector.extract_strided_slice %55 {offsets = [32, 0], sizes = [4, 1024], strides = [1, 1]} : vector<36x1024xbf16> to vector<4x1024xbf16>
    %c0_112 = arith.constant 0 : index
    %c0_113 = arith.constant 0 : index
    %156 = vector.load %arg3[%c0_112, %c0_113] : memref<8x4xbf16, #tpu.memory_space<vmem>>, vector<8x4xbf16>
    %cst_114 = arith.constant dense<0.000000e+00> : vector<8x1024xf32>
    %157 = tpu.matmul %156, %155, %cst_114 {dimension_numbers = #tpu.dot_dimension_numbers<[1], [0], [0], [1], [0, 0, 1, 1], [], []>} : vector<8x4xbf16>, vector<4x1024xbf16>, vector<8x1024xf32> -> vector<8x1024xf32>
    %158 = vector.broadcast %6 : vector<8x1xf32> to vector<8x1024xf32>
    %159 = arith.addf %157, %158 : vector<8x1024xf32>
    %160 = vector.extract_strided_slice %154 {offsets = [0, 0], sizes = [8, 384], strides = [1, 1]} : vector<8x768xf32> to vector<8x384xf32>
    %161 = vector.extract_strided_slice %159 {offsets = [0, 0], sizes = [8, 384], strides = [1, 1]} : vector<8x1024xf32> to vector<8x384xf32>
    %162 = arith.addf %160, %161 : vector<8x384xf32>
    %c0_115 = arith.constant 0 : index
    %c0_116 = arith.constant 0 : index
    %c0_117 = arith.constant 0 : index
    %163 = vector.load %arg6[%c0_115, %c0_116, %c0_117] : memref<2x8x384xf32, #tpu.memory_space<vmem>>, vector<1x8x384xf32>
    %164 = vector.shape_cast %163 : vector<1x8x384xf32> to vector<8x384xf32>
    %165 = vector.shape_cast %162 : vector<8x384xf32> to vector<1x8x384xf32>
    tpu.vector_store %arg6[%c0_115, %c0_116, %c0_117], %165 {strides = array<i32>} : memref<2x8x384xf32, #tpu.memory_space<vmem>>, vector<1x8x384xf32>,
    %166 = vector.extract_strided_slice %154 {offsets = [0, 384], sizes = [8, 384], strides = [1, 1]} : vector<8x768xf32> to vector<8x384xf32>
    %167 = vector.extract_strided_slice %159 {offsets = [0, 512], sizes = [8, 384], strides = [1, 1]} : vector<8x1024xf32> to vector<8x384xf32>
    %168 = arith.addf %166, %167 : vector<8x384xf32>
    %c1_118 = arith.constant 1 : index
    %c0_119 = arith.constant 0 : index
    %c0_120 = arith.constant 0 : index
    %169 = vector.load %arg6[%c1_118, %c0_119, %c0_120] : memref<2x8x384xf32, #tpu.memory_space<vmem>>, vector<1x8x384xf32>
    %170 = vector.shape_cast %169 : vector<1x8x384xf32> to vector<8x384xf32>
    %171 = vector.shape_cast %168 : vector<8x384xf32> to vector<1x8x384xf32>
    tpu.vector_store %arg6[%c1_118, %c0_119, %c0_120], %171 {strides = array<i32>} : memref<2x8x384xf32, #tpu.memory_space<vmem>>, vector<1x8x384xf32>,
    return
  }
}

</mosaic_0001>

<llo_original>
// kernel: tpu_custom_call.1
$region0: #{tpu_custom_call.1}
  #allocation0 [shape = 'u32[]', space=smem, size = 0x4, offset = 0x4, fixed_abs, tag = 'smem constant byte address 0x4 - core index']
  #allocation1 [shape = 'u32[72,128]{1,0:T(1,128)}', space=vmem, size = 0x9000, scoped, tag = 'internal scratch']
  #allocation2 [shape = 'bf16[4,640]{1,0:T(4,128)(2,1)}', space=vmem, size = 0x1400, scoped, tag = 'scratch operand']
  #allocation3 [shape = 'bf16[36,1024]{1,0:T(8,128)(2,1)}', space=vmem, size = 0x14000, scoped, tag = 'scratch operand']
  #allocation4 [shape = 'bf16[36,768]{1,0:T(8,128)(2,1)}', space=vmem, size = 0xf000, scoped, tag = 'scratch operand']
  %s0 = inlined_call_operand.hbm [shape: bf16[2,4,320], index: 0, kind: input, shape index: {}]
  %s1 = inlined_call_operand.vmem [shape: bf16[4,36], index: 1, kind: input, shape index: {}]
  %s2 = inlined_call_operand.vmem [shape: bf16[8,36], index: 2, kind: input, shape index: {}]
  %s3 = inlined_call_operand.vmem [shape: bf16[8,4], index: 3, kind: input, shape index: {}]
  %s4 = inlined_call_operand.hbm [shape: f32[8,8], index: 4, kind: input, shape index: {}]
  %s5 = inlined_call_operand.hbm [shape: f32[2,1024], index: 5, kind: input, shape index: {}]
  %s6 = inlined_call_operand.hbm [shape: f32[2,8,384], index: 6, kind: output, shape index: {}]
  %s7 = sld [smem:[#allocation0]]
  $region46: #{tpu_custom_call.1} parent=0
    _
  %s9 = ssub.s32 1, %s7
  %s10 = scalar_select 0, %s9, %s7
  $region1: #{tpu_custom_call.1} parent=0
    #allocation5 [shape = 'u8[6144]{0}', space=vmem, size = 0x1800, scoped, tag = 'input window, operand 0, single buffered']
    #allocation6 [shape = 's32[1]{0}', space=sflag, size = 0x4, scoped, tag = 'scoped memory for tpu_custom_call.1']
    #allocation7 [shape = 's32[1]{0}', space=sflag, size = 0x4, scoped, tag = 'scoped memory for tpu_custom_call.1']
    #allocation8 [shape = 'u8[4096]{0}', space=vmem, size = 0x1000, scoped, tag = 'input window, operand 4, single buffered']
    #allocation9 [shape = 's32[1]{0}', space=sflag, size = 0x4, scoped, tag = 'scoped memory for tpu_custom_call.1']
    #allocation10 [shape = 'u8[8192]{0}', space=vmem, size = 0x2000, scoped, tag = 'input window, operand 5, single buffered']
    #allocation11 [shape = 'u8[24576]{0}', space=vmem, size = 0x6000, scoped, tag = 'output window, operand 0, single buffered']
    %11 = vsyncpa [#allocation6], 0
    %12 = vsyncpa [#allocation9], 0
    %13 = vsyncpa [#allocation7], 0
    // Predicated region
    $region2: #{tpu_custom_call.1} parent=1 // pred_check
      _
    $region3: #{tpu_custom_call.1} parent=1 // pred_check_branch
      %15 = sbr.rel (0) target = $region5
    $region4: #{tpu_custom_call.1} parent=1 // pred_region
      %17 = vsyncadd [#allocation6], 0
      %s18 = sshll.u32 %s0, 4
      %s19 = int_to_ptr.hbm [resolvable:$true] %s18
      %s20 = sshll.u32 [#allocation5], 4
      %s21 = int_to_ptr.vmem [resolvable:$true] %s20
      %26 = dma.hbm_to_vmem [thread:$0]  %s19, 192, %s21, [#allocation6], 96, 96, 6
    $region5: #{tpu_custom_call.1} parent=1 // pred_fallthru
      _
    // Predicated region
    $region6: #{tpu_custom_call.1} parent=1 // pred_check
      _
    $region7: #{tpu_custom_call.1} parent=1 // pred_check_branch
      %28 = sbr.rel (0) target = $region9
    $region8: #{tpu_custom_call.1} parent=1 // pred_region
      _
    $region9: #{tpu_custom_call.1} parent=1 // pred_fallthru
      _
    // Predicated region
    $region10: #{tpu_custom_call.1} parent=1 // pred_check
      _
    $region11: #{tpu_custom_call.1} parent=1 // pred_check_branch
      %30 = sbr.rel (0) target = $region13
    $region12: #{tpu_custom_call.1} parent=1 // pred_region
      _
    $region13: #{tpu_custom_call.1} parent=1 // pred_fallthru
      _
    // Predicated region
    $region14: #{tpu_custom_call.1} parent=1 // pred_check
      _
    $region15: #{tpu_custom_call.1} parent=1 // pred_check_branch
      %32 = sbr.rel (0) target = $region17
    $region16: #{tpu_custom_call.1} parent=1 // pred_region
      _
    $region17: #{tpu_custom_call.1} parent=1 // pred_fallthru
      _
    // Predicated region
    $region18: #{tpu_custom_call.1} parent=1 // pred_check
      _
    $region19: #{tpu_custom_call.1} parent=1 // pred_check_branch
      %34 = sbr.rel (0) target = $region21
    $region20: #{tpu_custom_call.1} parent=1 // pred_region
      %36 = vsyncadd [#allocation9], 0
      %s38 = sshll.u32 %s4, 4
      %s39 = int_to_ptr.hbm [resolvable:$true] %s38
      %s40 = sshll.u32 [#allocation8], 4
      %s41 = int_to_ptr.vmem [resolvable:$true] %s40
      %43 = dma.hbm_to_vmem [thread:$0]  %s39, 128, %s41, [#allocation9]
    $region21: #{tpu_custom_call.1} parent=1 // pred_fallthru
      _
    // Predicated region
    $region22: #{tpu_custom_call.1} parent=1 // pred_check
      _
    $region23: #{tpu_custom_call.1} parent=1 // pred_check_branch
      %45 = sbr.rel (0) target = $region25
    $region24: #{tpu_custom_call.1} parent=1 // pred_region
      %47 = vsyncadd [#allocation9], 0
      %s49 = sshll.u32 %s5, 4
      %s50 = int_to_ptr.hbm [resolvable:$true] %s49
      %s51 = sshll.u32 [#allocation10], 4
      %s52 = int_to_ptr.vmem [resolvable:$true] %s51
      %54 = dma.hbm_to_vmem [thread:$0]  %s50, 256, %s52, [#allocation9]
    $region25: #{tpu_custom_call.1} parent=1 // pred_fallthru
      _
    // Predicated region
    $region26: #{tpu_custom_call.1} parent=1 // pred_check
      _
    $region27: #{tpu_custom_call.1} parent=1 // pred_check_branch
      %56 = sbr.rel (0) target = $region29
    $region28: #{tpu_custom_call.1} parent=1 // pred_region
      %58 = dma.done [#allocation6], 192
    $region29: #{tpu_custom_call.1} parent=1 // pred_fallthru
      _
    // Predicated region
    $region30: #{tpu_custom_call.1} parent=1 // pred_check
      _
    $region31: #{tpu_custom_call.1} parent=1 // pred_check_branch
      %60 = sbr.rel (0) target = $region33
    $region32: #{tpu_custom_call.1} parent=1 // pred_region
      %62 = dma.done [#allocation9], 128
    $region33: #{tpu_custom_call.1} parent=1 // pred_fallthru
      _
    // Predicated region
    $region34: #{tpu_custom_call.1} parent=1 // pred_check
      _
    $region35: #{tpu_custom_call.1} parent=1 // pred_check_branch
      %64 = sbr.rel (0) target = $region37
    $region36: #{tpu_custom_call.1} parent=1 // pred_region
      %66 = dma.done [#allocation9], 256
    $region37: #{tpu_custom_call.1} parent=1 // pred_fallthru
      _
    %v68 = vld [vmem:[#allocation8] sm:$0xf]
    %v69 = vld [vmem:[#allocation8] sm:$0xff]
    %v70 = vld [vmem:[#allocation10] ss:$2 sm:$0xff]
    %s71 = scalar_lea.vmem [#allocation10], 1
    %v72 = vld [vmem:[%s71] ss:$2 sm:$0x3f]
    %73 = vst [vmem:[#allocation2] sm:$0xff] 0
    %74 = vst [vmem:[#allocation2 + $0x8] sm:$0x3] 0
    %v75 = vld [vmem:[#allocation5] sm:$0x3f]
    %77 = vrot.lane.b32.xlu0 %v75, 40
    %v78 = vpop.permute.xlu0 %77
    %v79 = vrot.slane %v78, 6
    %vm80 = vcmask 326656
    %v81 = vsel %vm80, %v79, %v78
    %vm83 = vcmask 1041728
    %vm84 = vcmask 1043458
    %vm85 = vmor %vm84, %vm83
    %vm86 = vcmask 848900
    %vm87 = vmor %vm86, %vm85
    %88 = vst.msk [vmem:[#allocation2] sm:$0x3f] %vm87, %v81
    %v89 = vld [vmem:[#allocation2] sm:$0xff]
    %v90 = vld [vmem:[#allocation2 + $0x8] sm:$0x3]
    %92 = vst [vmem:[#allocation1] ss:$2 sm:$0xff] %v89
    %v93 = vld.sshfl [vmem:[#allocation1] sm:$0xff pattern:$0x75643120]
    %v94 = vld.sshfl [vmem:[#allocation1 + $0x8] sm:$0xff pattern:$0x75643120]
    %97 = vst [vmem:[#allocation3] sm:$0x33] %v93
    %98 = vst [vmem:[#allocation3 + $0x8] sm:$0x33] %v94
    %s99 = scalar_lea.vmem [#allocation1], 1
    %100 = vst [vmem:[%s99] ss:$2 sm:$0xff] %v89
    %s102 = scalar_lea.vmem [#allocation1], 17
    %103 = vst [vmem:[%s102] ss:$2 sm:$0xff] %v90
    %v104 = vld.sshfl [vmem:[#allocation1] sm:$0xff pattern:$0x75643120]
    %v106 = vld.sshfl [vmem:[#allocation1 + $0x8] sm:$0xff pattern:$0x75643120]
    %v108 = vld.sshfl [vmem:[#allocation1 + $0x10] sm:$0xff pattern:$0x75643120]
    %110 = vrot.lane.b32.xlu0 %v104, 127
    %v111 = vpop.permute.xlu0 %110
    %112 = vrot.lane.b32.xlu0 %v106, 127
    %v113 = vpop.permute.xlu0 %112
    %114 = vrot.lane.b32.xlu0 %v108, 127
    %v115 = vpop.permute.xlu0 %114
    %v116 = vrot.slane %v111, 4
    %v117 = vrot.slane %v113, 4
    %v118 = vrot.slane %v115, 4
    %vm119 = vcmask 1043456
    %v120 = vsel %vm119, %v116, %v117
    %vm121 = vcmask 1039360
    %v122 = vsel %vm121, %v111, %v120
    %v123 = vsel %vm119, %v117, %v118
    %v124 = vsel %vm121, %v113, %v123
    %127 = vst [vmem:[#allocation3] sm:$0xcc] %v122
    %128 = vst [vmem:[#allocation3 + $0x8] sm:$0xcc] %v124
    %129 = vst [vmem:[#allocation1] ss:$2 sm:$0xff] %v89
    %s130 = scalar_lea.vmem [#allocation1], 16
    %131 = vst [vmem:[%s130] ss:$2 sm:$0xff] %v90
    %v132 = vld.sshfl [vmem:[#allocation1] sm:$0xff pattern:$0x75643120]
    %v134 = vld.sshfl [vmem:[#allocation1 + $0x8] sm:$0xff pattern:$0x75643120]
    %v136 = vld.sshfl [vmem:[#allocation1 + $0x10] sm:$0xff pattern:$0x75643120]
    %138 = vrot.lane.b32.xlu0 %v132, 126
    %v139 = vpop.permute.xlu0 %138
    %140 = vrot.lane.b32.xlu0 %v134, 126
    %v141 = vpop.permute.xlu0 %140
    %142 = vrot.lane.b32.xlu0 %v136, 126
    %v143 = vpop.permute.xlu0 %142
    %v144 = vrot.slane %v139, 4
    %v145 = vrot.slane %v141, 4
    %v146 = vrot.slane %v143, 4
    %v147 = vsel %vm119, %v144, %v145
    %vm148 = vcmask 1031168
    %v149 = vsel %vm148, %v139, %v147
    %v150 = vsel %vm119, %v145, %v146
    %v151 = vsel %vm148, %v141, %v150
    %154 = vst [vmem:[#allocation3 + $0x20] sm:$0x33] %v149
    %155 = vst [vmem:[#allocation3 + $0x28] sm:$0x33] %v151
    %s156 = scalar_lea.vmem [#allocation1], 1
    %157 = vst [vmem:[%s156] ss:$2 sm:$0xff] %v89
    %s158 = scalar_lea.vmem [#allocation1], 17
    %159 = vst [vmem:[%s158] ss:$2 sm:$0xff] %v90
    %v160 = vld.sshfl [vmem:[#allocation1] sm:$0xff pattern:$0x75643120]
    %v162 = vld.sshfl [vmem:[#allocation1 + $0x8] sm:$0xff pattern:$0x75643120]
    %v164 = vld.sshfl [vmem:[#allocation1 + $0x10] sm:$0xff pattern:$0x75643120]
    %166 = vrot.lane.b32.xlu0 %v160, 108
    %v167 = vpop.permute.xlu0 %166
    %168 = vrot.lane.b32.xlu0 %v162, 108
    %v169 = vpop.permute.xlu0 %168
    %170 = vrot.lane.b32.xlu0 %v164, 108
    %v171 = vpop.permute.xlu0 %170
    %v172 = vrot.slane %v167, 4
    %v173 = vrot.slane %v169, 4
    %v174 = vrot.slane %v171, 4
    %v175 = vsel %vm119, %v172, %v173
    %vm176 = vcmask 883712
    %v177 = vsel %vm176, %v167, %v175
    %v178 = vsel %vm119, %v173, %v174
    %v179 = vsel %vm176, %v169, %v178
    %182 = vst [vmem:[#allocation3 + $0x20] sm:$0xcc] %v177
    %183 = vst [vmem:[#allocation3 + $0x28] sm:$0xcc] %v179
    %184 = vst [vmem:[#allocation1] ss:$2 sm:$0xff] %v89
    %s185 = scalar_lea.vmem [#allocation1], 16
    %186 = vst [vmem:[%s185] ss:$2 sm:$0xff] %v90
    %v187 = vld.sshfl [vmem:[#allocation1] sm:$0xff pattern:$0x75643120]
    %v189 = vld.sshfl [vmem:[#allocation1 + $0x8] sm:$0xff pattern:$0x75643120]
    %v191 = vld.sshfl [vmem:[#allocation1 + $0x10] sm:$0xff pattern:$0x75643120]
    %193 = vrot.lane.b32.xlu0 %v187, 107
    %v194 = vpop.permute.xlu0 %193
    %195 = vrot.lane.b32.xlu0 %v189, 107
    %v196 = vpop.permute.xlu0 %195
    %197 = vrot.lane.b32.xlu0 %v191, 107
    %v198 = vpop.permute.xlu0 %197
    %v199 = vrot.slane %v194, 4
    %v200 = vrot.slane %v196, 4
    %v201 = vrot.slane %v198, 4
    %v202 = vsel %vm119, %v199, %v200
    %vm203 = vcmask 875520
    %v204 = vsel %vm203, %v194, %v202
    %v205 = vsel %vm119, %v200, %v201
    %v206 = vsel %vm203, %v196, %v205
    %209 = vst [vmem:[#allocation3 + $0x40] sm:$0x33] %v204
    %210 = vst [vmem:[#allocation3 + $0x48] sm:$0x33] %v206
    %s211 = scalar_lea.vmem [#allocation1], 1
    %212 = vst [vmem:[%s211] ss:$2 sm:$0xff] %v89
    %s213 = scalar_lea.vmem [#allocation1], 17
    %214 = vst [vmem:[%s213] ss:$2 sm:$0xff] %v90
    %v215 = vld.sshfl [vmem:[#allocation1] sm:$0xff pattern:$0x75643120]
    %v217 = vld.sshfl [vmem:[#allocation1 + $0x8] sm:$0xff pattern:$0x75643120]
    %v219 = vld.sshfl [vmem:[#allocation1 + $0x10] sm:$0xff pattern:$0x75643120]
    %221 = vrot.lane.b32.xlu0 %v215, 106
    %v222 = vpop.permute.xlu0 %221
    %223 = vrot.lane.b32.xlu0 %v217, 106
    %v224 = vpop.permute.xlu0 %223
    %225 = vrot.lane.b32.xlu0 %v219, 106
    %v226 = vpop.permute.xlu0 %225
    %v227 = vrot.slane %v222, 4
    %v228 = vrot.slane %v224, 4
    %v229 = vrot.slane %v226, 4
    %v230 = vsel %vm119, %v227, %v228
    %vm231 = vcmask 867328
    %v232 = vsel %vm231, %v222, %v230
    %v233 = vsel %vm119, %v228, %v229
    %v234 = vsel %vm231, %v224, %v233
    %237 = vst [vmem:[#allocation3 + $0x40] sm:$0xcc] %v232
    %238 = vst [vmem:[#allocation3 + $0x48] sm:$0xcc] %v234
    %239 = vst [vmem:[#allocation1] ss:$2 sm:$0xff] %v89
    %s240 = scalar_lea.vmem [#allocation1], 16
    %241 = vst [vmem:[%s240] ss:$2 sm:$0xff] %v90
    %v242 = vld.sshfl [vmem:[#allocation1] sm:$0xff pattern:$0x75643120]
    %v244 = vld.sshfl [vmem:[#allocation1 + $0x8] sm:$0xff pattern:$0x75643120]
    %v246 = vld.sshfl [vmem:[#allocation1 + $0x10] sm:$0xff pattern:$0x75643120]
    %248 = vrot.lane.b32.xlu0 %v242, 88
    %v249 = vpop.permute.xlu0 %248
    %250 = vrot.lane.b32.xlu0 %v244, 88
    %v251 = vpop.permute.xlu0 %250
    %252 = vrot.lane.b32.xlu0 %v246, 88
    %v253 = vpop.permute.xlu0 %252
    %v254 = vrot.slane %v249, 4
    %v255 = vrot.slane %v251, 4
    %v256 = vrot.slane %v253, 4
    %v257 = vsel %vm119, %v254, %v255
    %vm258 = vcmask 719872
    %v259 = vsel %vm258, %v249, %v257
    %v260 = vsel %vm119, %v255, %v256
    %v261 = vsel %vm258, %v251, %v260
    %264 = vst [vmem:[#allocation3 + $0x60] sm:$0x33] %v259
    %265 = vst [vmem:[#allocation3 + $0x68] sm:$0x33] %v261
    %s266 = scalar_lea.vmem [#allocation1], 1
    %267 = vst [vmem:[%s266] ss:$2 sm:$0xff] %v89
    %s268 = scalar_lea.vmem [#allocation1], 17
    %269 = vst [vmem:[%s268] ss:$2 sm:$0xff] %v90
    %v270 = vld.sshfl [vmem:[#allocation1] sm:$0xff pattern:$0x75643120]
    %v272 = vld.sshfl [vmem:[#allocation1 + $0x8] sm:$0xff pattern:$0x75643120]
    %v274 = vld.sshfl [vmem:[#allocation1 + $0x10] sm:$0xff pattern:$0x75643120]
    %276 = vrot.lane.b32.xlu0 %v270, 87
    %v277 = vpop.permute.xlu0 %276
    %278 = vrot.lane.b32.xlu0 %v272, 87
    %v279 = vpop.permute.xlu0 %278
    %280 = vrot.lane.b32.xlu0 %v274, 87
    %v281 = vpop.permute.xlu0 %280
    %v282 = vrot.slane %v277, 4
    %v283 = vrot.slane %v279, 4
    %v284 = vrot.slane %v281, 4
    %v285 = vsel %vm119, %v282, %v283
    %vm286 = vcmask 711680
    %v287 = vsel %vm286, %v277, %v285
    %v288 = vsel %vm119, %v283, %v284
    %v289 = vsel %vm286, %v279, %v288
    %292 = vst [vmem:[#allocation3 + $0x60] sm:$0xcc] %v287
    %293 = vst [vmem:[#allocation3 + $0x68] sm:$0xcc] %v289
    %294 = vst [vmem:[#allocation1] ss:$2 sm:$0xff] %v89
    %s295 = scalar_lea.vmem [#allocation1], 16
    %296 = vst [vmem:[%s295] ss:$2 sm:$0xff] %v90
    %v297 = vld.sshfl [vmem:[#allocation1] sm:$0xff pattern:$0x75643120]
    %v299 = vld.sshfl [vmem:[#allocation1 + $0x8] sm:$0xff pattern:$0x75643120]
    %v301 = vld.sshfl [vmem:[#allocation1 + $0x10] sm:$0xff pattern:$0x75643120]
    %303 = vrot.lane.b32.xlu0 %v297, 86
    %v304 = vpop.permute.xlu0 %303
    %305 = vrot.lane.b32.xlu0 %v299, 86
    %v306 = vpop.permute.xlu0 %305
    %307 = vrot.lane.b32.xlu0 %v301, 86
    %v308 = vpop.permute.xlu0 %307
    %v309 = vrot.slane %v304, 4
    %v310 = vrot.slane %v306, 4
    %v311 = vrot.slane %v308, 4
    %v312 = vsel %vm119, %v309, %v310
    %vm313 = vcmask 703488
    %v314 = vsel %vm313, %v304, %v312
    %v315 = vsel %vm119, %v310, %v311
    %v316 = vsel %vm313, %v306, %v315
    %319 = vst [vmem:[#allocation3 + $0x80] sm:$0x33] %v314
    %320 = vst [vmem:[#allocation3 + $0x88] sm:$0x33] %v316
    %s321 = scalar_lea.vmem [#allocation5], 6
    %v322 = vld [vmem:[%s321] sm:$0x3f]
    %324 = vrot.lane.b32.xlu0 %v322, 40
    %v325 = vpop.permute.xlu0 %324
    %v326 = vrot.slane %v325, 6
    %v327 = vsel %vm80, %v326, %v325
    %329 = vst.msk [vmem:[#allocation2] sm:$0x3f] %vm87, %v327
    %v330 = vld [vmem:[#allocation2] sm:$0xff]
    %v331 = vld [vmem:[#allocation2 + $0x8] sm:$0x3]
    %333 = vst [vmem:[#allocation1] ss:$2 sm:$0xff] %v330
    %v334 = vld.sshfl [vmem:[#allocation1] sm:$0xff pattern:$0x75643120]
    %v335 = vld.sshfl [vmem:[#allocation1 + $0x8] sm:$0xff pattern:$0x75643120]
    %338 = vst [vmem:[#allocation3 + $0x10] sm:$0x33] %v334
    %339 = vst [vmem:[#allocation3 + $0x18] sm:$0x33] %v335
    %s340 = scalar_lea.vmem [#allocation1], 1
    %341 = vst [vmem:[%s340] ss:$2 sm:$0xff] %v330
    %s343 = scalar_lea.vmem [#allocation1], 17
    %344 = vst [vmem:[%s343] ss:$2 sm:$0xff] %v331
    %v345 = vld.sshfl [vmem:[#allocation1] sm:$0xff pattern:$0x75643120]
    %v347 = vld.sshfl [vmem:[#allocation1 + $0x8] sm:$0xff pattern:$0x75643120]
    %v349 = vld.sshfl [vmem:[#allocation1 + $0x10] sm:$0xff pattern:$0x75643120]
    %351 = vrot.lane.b32.xlu0 %v345, 127
    %v352 = vpop.permute.xlu0 %351
    %353 = vrot.lane.b32.xlu0 %v347, 127
    %v354 = vpop.permute.xlu0 %353
    %355 = vrot.lane.b32.xlu0 %v349, 127
    %v356 = vpop.permute.xlu0 %355
    %v357 = vrot.slane %v352, 4
    %v358 = vrot.slane %v354, 4
    %v359 = vrot.slane %v356, 4
    %v360 = vsel %vm119, %v357, %v358
    %v361 = vsel %vm121, %v352, %v360
    %v362 = vsel %vm119, %v358, %v359
    %v363 = vsel %vm121, %v354, %v362
    %366 = vst [vmem:[#allocation3 + $0x10] sm:$0xcc] %v361
    %367 = vst [vmem:[#allocation3 + $0x18] sm:$0xcc] %v363
    %368 = vst [vmem:[#allocation1] ss:$2 sm:$0xff] %v330
    %s369 = scalar_lea.vmem [#allocation1], 16
    %370 = vst [vmem:[%s369] ss:$2 sm:$0xff] %v331
    %v371 = vld.sshfl [vmem:[#allocation1] sm:$0xff pattern:$0x75643120]
    %v373 = vld.sshfl [vmem:[#allocation1 + $0x8] sm:$0xff pattern:$0x75643120]
    %v375 = vld.sshfl [vmem:[#allocation1 + $0x10] sm:$0xff pattern:$0x75643120]
    %377 = vrot.lane.b32.xlu0 %v371, 126
    %v378 = vpop.permute.xlu0 %377
    %379 = vrot.lane.b32.xlu0 %v373, 126
    %v380 = vpop.permute.xlu0 %379
    %381 = vrot.lane.b32.xlu0 %v375, 126
    %v382 = vpop.permute.xlu0 %381
    %v383 = vrot.slane %v378, 4
    %v384 = vrot.slane %v380, 4
    %v385 = vrot.slane %v382, 4
    %v386 = vsel %vm119, %v383, %v384
    %v387 = vsel %vm148, %v378, %v386
    %v388 = vsel %vm119, %v384, %v385
    %v389 = vsel %vm148, %v380, %v388
    %392 = vst [vmem:[#allocation3 + $0x30] sm:$0x33] %v387
    %393 = vst [vmem:[#allocation3 + $0x38] sm:$0x33] %v389
    %s394 = scalar_lea.vmem [#allocation1], 1
    %395 = vst [vmem:[%s394] ss:$2 sm:$0xff] %v330
    %s396 = scalar_lea.vmem [#allocation1], 17
    %397 = vst [vmem:[%s396] ss:$2 sm:$0xff] %v331
    %v398 = vld.sshfl [vmem:[#allocation1] sm:$0xff pattern:$0x75643120]
    %v400 = vld.sshfl [vmem:[#allocation1 + $0x8] sm:$0xff pattern:$0x75643120]
    %v402 = vld.sshfl [vmem:[#allocation1 + $0x10] sm:$0xff pattern:$0x75643120]
    %404 = vrot.lane.b32.xlu0 %v398, 108
    %v405 = vpop.permute.xlu0 %404
    %406 = vrot.lane.b32.xlu0 %v400, 108
    %v407 = vpop.permute.xlu0 %406
    %408 = vrot.lane.b32.xlu0 %v402, 108
    %v409 = vpop.permute.xlu0 %408
    %v410 = vrot.slane %v405, 4
    %v411 = vrot.slane %v407, 4
    %v412 = vrot.slane %v409, 4
    %v413 = vsel %vm119, %v410, %v411
    %v414 = vsel %vm176, %v405, %v413
    %v415 = vsel %vm119, %v411, %v412
    %v416 = vsel %vm176, %v407, %v415
    %419 = vst [vmem:[#allocation3 + $0x30] sm:$0xcc] %v414
    %420 = vst [vmem:[#allocation3 + $0x38] sm:$0xcc] %v416
    %421 = vst [vmem:[#allocation1] ss:$2 sm:$0xff] %v330
    %s422 = scalar_lea.vmem [#allocation1], 16
    %423 = vst [vmem:[%s422] ss:$2 sm:$0xff] %v331
    %v424 = vld.sshfl [vmem:[#allocation1] sm:$0xff pattern:$0x75643120]
    %v426 = vld.sshfl [vmem:[#allocation1 + $0x8] sm:$0xff pattern:$0x75643120]
    %v428 = vld.sshfl [vmem:[#allocation1 + $0x10] sm:$0xff pattern:$0x75643120]
    %430 = vrot.lane.b32.xlu0 %v424, 107
    %v431 = vpop.permute.xlu0 %430
    %432 = vrot.lane.b32.xlu0 %v426, 107
    %v433 = vpop.permute.xlu0 %432
    %434 = vrot.lane.b32.xlu0 %v428, 107
    %v435 = vpop.permute.xlu0 %434
    %v436 = vrot.slane %v431, 4
    %v437 = vrot.slane %v433, 4
    %v438 = vrot.slane %v435, 4
    %v439 = vsel %vm119, %v436, %v437
    %v440 = vsel %vm203, %v431, %v439
    %v441 = vsel %vm119, %v437, %v438
    %v442 = vsel %vm203, %v433, %v441
    %445 = vst [vmem:[#allocation3 + $0x50] sm:$0x33] %v440
    %446 = vst [vmem:[#allocation3 + $0x58] sm:$0x33] %v442
    %s447 = scalar_lea.vmem [#allocation1], 1
    %448 = vst [vmem:[%s447] ss:$2 sm:$0xff] %v330
    %s449 = scalar_lea.vmem [#allocation1], 17
    %450 = vst [vmem:[%s449] ss:$2 sm:$0xff] %v331
    %v451 = vld.sshfl [vmem:[#allocation1] sm:$0xff pattern:$0x75643120]
    %v453 = vld.sshfl [vmem:[#allocation1 + $0x8] sm:$0xff pattern:$0x75643120]
    %v455 = vld.sshfl [vmem:[#allocation1 + $0x10] sm:$0xff pattern:$0x75643120]
    %457 = vrot.lane.b32.xlu0 %v451, 106
    %v458 = vpop.permute.xlu0 %457
    %459 = vrot.lane.b32.xlu0 %v453, 106
    %v460 = vpop.permute.xlu0 %459
    %461 = vrot.lane.b32.xlu0 %v455, 106
    %v462 = vpop.permute.xlu0 %461
    %v463 = vrot.slane %v458, 4
    %v464 = vrot.slane %v460, 4
    %v465 = vrot.slane %v462, 4
    %v466 = vsel %vm119, %v463, %v464
    %v467 = vsel %vm231, %v458, %v466
    %v468 = vsel %vm119, %v464, %v465
    %v469 = vsel %vm231, %v460, %v468
    %472 = vst [vmem:[#allocation3 + $0x50] sm:$0xcc] %v467
    %473 = vst [vmem:[#allocation3 + $0x58] sm:$0xcc] %v469
    %474 = vst [vmem:[#allocation1] ss:$2 sm:$0xff] %v330
    %s475 = scalar_lea.vmem [#allocation1], 16
    %476 = vst [vmem:[%s475] ss:$2 sm:$0xff] %v331
    %v477 = vld.sshfl [vmem:[#allocation1] sm:$0xff pattern:$0x75643120]
    %v479 = vld.sshfl [vmem:[#allocation1 + $0x8] sm:$0xff pattern:$0x75643120]
    %v481 = vld.sshfl [vmem:[#allocation1 + $0x10] sm:$0xff pattern:$0x75643120]
    %483 = vrot.lane.b32.xlu0 %v477, 88
    %v484 = vpop.permute.xlu0 %483
    %485 = vrot.lane.b32.xlu0 %v479, 88
    %v486 = vpop.permute.xlu0 %485
    %487 = vrot.lane.b32.xlu0 %v481, 88
    %v488 = vpop.permute.xlu0 %487
    %v489 = vrot.slane %v484, 4
    %v490 = vrot.slane %v486, 4
    %v491 = vrot.slane %v488, 4
    %v492 = vsel %vm119, %v489, %v490
    %v493 = vsel %vm258, %v484, %v492
    %v494 = vsel %vm119, %v490, %v491
    %v495 = vsel %vm258, %v486, %v494
    %498 = vst [vmem:[#allocation3 + $0x70] sm:$0x33] %v493
    %499 = vst [vmem:[#allocation3 + $0x78] sm:$0x33] %v495
    %s500 = scalar_lea.vmem [#allocation1], 1
    %501 = vst [vmem:[%s500] ss:$2 sm:$0xff] %v330
    %s502 = scalar_lea.vmem [#allocation1], 17
    %503 = vst [vmem:[%s502] ss:$2 sm:$0xff] %v331
    %v504 = vld.sshfl [vmem:[#allocation1] sm:$0xff pattern:$0x75643120]
    %v506 = vld.sshfl [vmem:[#allocation1 + $0x8] sm:$0xff pattern:$0x75643120]
    %v508 = vld.sshfl [vmem:[#allocation1 + $0x10] sm:$0xff pattern:$0x75643120]
    %510 = vrot.lane.b32.xlu0 %v504, 87
    %v511 = vpop.permute.xlu0 %510
    %512 = vrot.lane.b32.xlu0 %v506, 87
    %v513 = vpop.permute.xlu0 %512
    %514 = vrot.lane.b32.xlu0 %v508, 87
    %v515 = vpop.permute.xlu0 %514
    %v516 = vrot.slane %v511, 4
    %v517 = vrot.slane %v513, 4
    %v518 = vrot.slane %v515, 4
    %v519 = vsel %vm119, %v516, %v517
    %v520 = vsel %vm286, %v511, %v519
    %v521 = vsel %vm119, %v517, %v518
    %v522 = vsel %vm286, %v513, %v521
    %525 = vst [vmem:[#allocation3 + $0x70] sm:$0xcc] %v520
    %526 = vst [vmem:[#allocation3 + $0x78] sm:$0xcc] %v522
    %527 = vst [vmem:[#allocation1] ss:$2 sm:$0xff] %v330
    %s528 = scalar_lea.vmem [#allocation1], 16
    %529 = vst [vmem:[%s528] ss:$2 sm:$0xff] %v331
    %v530 = vld.sshfl [vmem:[#allocation1] sm:$0xff pattern:$0x75643120]
    %v532 = vld.sshfl [vmem:[#allocation1 + $0x8] sm:$0xff pattern:$0x75643120]
    %v534 = vld.sshfl [vmem:[#allocation1 + $0x10] sm:$0xff pattern:$0x75643120]
    %536 = vrot.lane.b32.xlu0 %v530, 86
    %v537 = vpop.permute.xlu0 %536
    %538 = vrot.lane.b32.xlu0 %v532, 86
    %v539 = vpop.permute.xlu0 %538
    %540 = vrot.lane.b32.xlu0 %v534, 86
    %v541 = vpop.permute.xlu0 %540
    %v542 = vrot.slane %v537, 4
    %v543 = vrot.slane %v539, 4
    %v544 = vrot.slane %v541, 4
    %v545 = vsel %vm119, %v542, %v543
    %v546 = vsel %vm313, %v537, %v545
    %v547 = vsel %vm119, %v543, %v544
    %v548 = vsel %vm313, %v539, %v547
    %551 = vst [vmem:[#allocation3 + $0x90] sm:$0x33] %v546
    %552 = vst [vmem:[#allocation3 + $0x98] sm:$0x33] %v548
    %v553 = vld [vmem:[#allocation3] sm:$0xff]
    %v554 = vld [vmem:[#allocation3 + $0x8] sm:$0xff]
    %v555 = vld [vmem:[#allocation3 + $0x10] sm:$0xff]
    %v556 = vld [vmem:[#allocation3 + $0x18] sm:$0xff]
    %v557 = vld [vmem:[#allocation3 + $0x20] sm:$0xff]
    %v558 = vld [vmem:[#allocation3 + $0x28] sm:$0xff]
    %v559 = vld [vmem:[#allocation3 + $0x30] sm:$0xff]
    %v560 = vld [vmem:[#allocation3 + $0x38] sm:$0xff]
    %v561 = vld [vmem:[#allocation3 + $0x40] sm:$0xff]
    %v562 = vld [vmem:[#allocation3 + $0x48] sm:$0xff]
    %v563 = vld [vmem:[#allocation3 + $0x50] sm:$0xff]
    %v564 = vld [vmem:[#allocation3 + $0x58] sm:$0xff]
    %v565 = vld [vmem:[#allocation3 + $0x60] sm:$0xff]
    %v566 = vld [vmem:[#allocation3 + $0x68] sm:$0xff]
    %v567 = vld [vmem:[#allocation3 + $0x70] sm:$0xff]
    %v568 = vld [vmem:[#allocation3 + $0x78] sm:$0xff]
    %v569 = vld [vmem:[#allocation3 + $0x80] sm:$0x33]
    %v570 = vld [vmem:[#allocation3 + $0x88] sm:$0x33]
    %v571 = vld [vmem:[#allocation3 + $0x90] sm:$0x33]
    %v572 = vld [vmem:[#allocation3 + $0x98] sm:$0x33]
    %v573 = vld [vmem:[%s1] sm:$0x3]
    %575 = vset.pattern.permute.xlu0 0
    %576 = vperm.xlu0 %575, %v68
    %v577 = vpop.permute.xlu0 %576
    %v599 = vunpack.c.l.b16 %v553
    %v600 = vunpack.c.h.b16 %v553
    %v601 = vunpack.c.l.b16 %v554
    %v602 = vunpack.c.h.b16 %v554
    %v603 = vunpack.c.l.b16 %v555
    %v604 = vunpack.c.h.b16 %v555
    %v605 = vunpack.c.l.b16 %v556
    %v606 = vunpack.c.h.b16 %v556
    %v607 = vunpack.c.l.b16 %v557
    %v608 = vunpack.c.h.b16 %v557
    %v609 = vunpack.c.l.b16 %v558
    %v610 = vunpack.c.h.b16 %v558
    %v611 = vunpack.c.l.b16 %v559
    %v612 = vunpack.c.h.b16 %v559
    %v613 = vunpack.c.l.b16 %v560
    %v614 = vunpack.c.h.b16 %v560
    %v615 = vunpack.c.l.b16 %v561
    %v616 = vunpack.c.h.b16 %v561
    %v617 = vunpack.c.l.b16 %v562
    %v618 = vunpack.c.h.b16 %v562
    %v619 = vunpack.c.l.b16 %v563
    %v620 = vunpack.c.h.b16 %v563
    %v621 = vunpack.c.l.b16 %v564
    %v622 = vunpack.c.h.b16 %v564
    %v623 = vunpack.c.l.b16 %v565
    %v624 = vunpack.c.h.b16 %v565
    %v625 = vunpack.c.l.b16 %v566
    %v626 = vunpack.c.h.b16 %v566
    %v627 = vunpack.c.l.b16 %v567
    %v628 = vunpack.c.h.b16 %v567
    %v629 = vunpack.c.l.b16 %v568
    %v630 = vunpack.c.h.b16 %v568
    %v631 = vunpack.c.l.b16 %v569
    %v632 = vunpack.c.h.b16 %v569
    %v633 = vunpack.c.l.b16 %v570
    %v634 = vunpack.c.h.b16 %v570
    %v635 = vunpack.c.l.b16 %v571
    %v636 = vunpack.c.h.b16 %v571
    %v637 = vunpack.c.l.b16 %v572
    %v638 = vunpack.c.h.b16 %v572
    %v639 = vpack.c.b16 %v607, %v599
    %v640 = vpack.c.b16 %v608, %v600
    %v641 = vpack.c.b16 %v609, %v601
    %v642 = vpack.c.b16 %v610, %v602
    %v643 = vpack.c.b16 %v611, %v603
    %v644 = vpack.c.b16 %v612, %v604
    %v645 = vpack.c.b16 %v613, %v605
    %v646 = vpack.c.b16 %v614, %v606
    %v647 = vpack.c.b16 %v623, %v615
    %v648 = vpack.c.b16 %v624, %v616
    %v649 = vpack.c.b16 %v625, %v617
    %v650 = vpack.c.b16 %v626, %v618
    %v651 = vpack.c.b16 %v627, %v619
    %v652 = vpack.c.b16 %v628, %v620
    %v653 = vpack.c.b16 %v629, %v621
    %v654 = vpack.c.b16 %v630, %v622
    %v655 = vpack.c.b16 %v631, %v631
    %v656 = vpack.c.b16 %v632, %v632
    %v657 = vpack.c.b16 %v633, %v633
    %v658 = vpack.c.b16 %v634, %v634
    %v659 = vpack.c.b16 %v635, %v635
    %v660 = vpack.c.b16 %v636, %v636
    %v661 = vpack.c.b16 %v637, %v637
    %v662 = vpack.c.b16 %v638, %v638
    %vm679 = vcmask 293888
    %v681 = vsel %vm679, %v573, 0
    %vm683 = vcmask 1041408
    %v685 = vsel %vm683, %v655, 0
    %v688 = vsel %vm683, %v656, 0
    %v691 = vsel %vm683, %v657, 0
    %v694 = vsel %vm683, %v658, 0
    %v697 = vsel %vm683, %v659, 0
    %v700 = vsel %vm683, %v660, 0
    %v703 = vsel %vm683, %v661, 0
    %v706 = vsel %vm683, %v662, 0
    %708 = vmatpush.bf16.msra.mxu0 0
    %709 = vmatpush.bf16.msra.mxu0 0
    %710 = vmatpush.bf16.msra.mxu0 0
    %711 = vmatpush.bf16.msra.mxu0 0
    %712 = vmatpush.bf16.msra.mxu0 0
    %713 = vmatpush.bf16.msra.mxu0 %v685
    %714 = vmatpush.bf16.msra.mxu0 %v647
    %715 = vmatpush.bf16.msra.mxu0 %v639
    %716 = vmatmul.bf16.gmra.mxu0 %v681
    %v717 = vpop.f32.mrf.mxu0
    %v718 = vadd.f32 %v577, %v717
    %v719 = vpop.f32.mrf.mxu0
    %720 = vdwg.mxu0
    %721 = vmatpush.bf16.msra.mxu0 0
    %722 = vmatpush.bf16.msra.mxu0 0
    %723 = vmatpush.bf16.msra.mxu0 0
    %724 = vmatpush.bf16.msra.mxu0 0
    %725 = vmatpush.bf16.msra.mxu0 0
    %726 = vmatpush.bf16.msra.mxu0 %v688
    %727 = vmatpush.bf16.msra.mxu0 %v648
    %728 = vmatpush.bf16.msra.mxu0 %v640
    %729 = vmatmul.bf16.gmra.mxu0 %v681
    %v730 = vpop.f32.mrf.mxu0
    %v731 = vadd.f32 %v577, %v730
    %v732 = vpop.f32.mrf.mxu0
    %733 = vdwg.mxu0
    %734 = vmatpush.bf16.msra.mxu0 0
    %735 = vmatpush.bf16.msra.mxu0 0
    %736 = vmatpush.bf16.msra.mxu0 0
    %737 = vmatpush.bf16.msra.mxu0 0
    %738 = vmatpush.bf16.msra.mxu0 0
    %739 = vmatpush.bf16.msra.mxu0 %v691
    %740 = vmatpush.bf16.msra.mxu0 %v649
    %741 = vmatpush.bf16.msra.mxu0 %v641
    %742 = vmatmul.bf16.gmra.mxu0 %v681
    %v743 = vpop.f32.mrf.mxu0
    %v744 = vadd.f32 %v577, %v743
    %v745 = vpop.f32.mrf.mxu0
    %746 = vdwg.mxu0
    %747 = vmatpush.bf16.msra.mxu0 0
    %748 = vmatpush.bf16.msra.mxu0 0
    %749 = vmatpush.bf16.msra.mxu0 0
    %750 = vmatpush.bf16.msra.mxu0 0
    %751 = vmatpush.bf16.msra.mxu0 0
    %752 = vmatpush.bf16.msra.mxu0 %v694
    %753 = vmatpush.bf16.msra.mxu0 %v650
    %754 = vmatpush.bf16.msra.mxu0 %v642
    %755 = vmatmul.bf16.gmra.mxu0 %v681
    %v756 = vpop.f32.mrf.mxu0
    %v757 = vadd.f32 %v577, %v756
    %v758 = vpop.f32.mrf.mxu0
    %759 = vdwg.mxu0
    %760 = vmatpush.bf16.msra.mxu0 0
    %761 = vmatpush.bf16.msra.mxu0 0
    %762 = vmatpush.bf16.msra.mxu0 0
    %763 = vmatpush.bf16.msra.mxu0 0
    %764 = vmatpush.bf16.msra.mxu0 0
    %765 = vmatpush.bf16.msra.mxu0 %v697
    %766 = vmatpush.bf16.msra.mxu0 %v651
    %767 = vmatpush.bf16.msra.mxu0 %v643
    %768 = vmatmul.bf16.gmra.mxu0 %v681
    %v769 = vpop.f32.mrf.mxu0
    %v770 = vadd.f32 %v577, %v769
    %v771 = vpop.f32.mrf.mxu0
    %772 = vdwg.mxu0
    %773 = vmatpush.bf16.msra.mxu0 0
    %774 = vmatpush.bf16.msra.mxu0 0
    %775 = vmatpush.bf16.msra.mxu0 0
    %776 = vmatpush.bf16.msra.mxu0 0
    %777 = vmatpush.bf16.msra.mxu0 0
    %778 = vmatpush.bf16.msra.mxu0 %v700
    %779 = vmatpush.bf16.msra.mxu0 %v652
    %780 = vmatpush.bf16.msra.mxu0 %v644
    %781 = vmatmul.bf16.gmra.mxu0 %v681
    %v782 = vpop.f32.mrf.mxu0
    %v783 = vadd.f32 %v577, %v782
    %v784 = vpop.f32.mrf.mxu0
    %785 = vdwg.mxu0
    %786 = vmatpush.bf16.msra.mxu0 0
    %787 = vmatpush.bf16.msra.mxu0 0
    %788 = vmatpush.bf16.msra.mxu0 0
    %789 = vmatpush.bf16.msra.mxu0 0
    %790 = vmatpush.bf16.msra.mxu0 0
    %791 = vmatpush.bf16.msra.mxu0 %v703
    %792 = vmatpush.bf16.msra.mxu0 %v653
    %793 = vmatpush.bf16.msra.mxu0 %v645
    %794 = vmatmul.bf16.gmra.mxu0 %v681
    %v795 = vpop.f32.mrf.mxu0
    %v796 = vadd.f32 %v577, %v795
    %v797 = vpop.f32.mrf.mxu0
    %798 = vdwg.mxu0
    %799 = vmatpush.bf16.msra.mxu0 0
    %800 = vmatpush.bf16.msra.mxu0 0
    %801 = vmatpush.bf16.msra.mxu0 0
    %802 = vmatpush.bf16.msra.mxu0 0
    %803 = vmatpush.bf16.msra.mxu0 0
    %804 = vmatpush.bf16.msra.mxu0 %v706
    %805 = vmatpush.bf16.msra.mxu0 %v654
    %806 = vmatpush.bf16.msra.mxu0 %v646
    %807 = vmatmul.bf16.gmra.mxu0 %v681
    %v808 = vpop.f32.mrf.mxu0
    %v809 = vadd.f32 %v577, %v808
    %v810 = vpop.f32.mrf.mxu0
    %811 = vdwg.mxu0
    %v813 = vperm.slane %v70, 0
    %v814 = vperm.slane %v70, 1
    %v815 = vperm.slane %v70, 2
    %v816 = vperm.slane %v70, 3
    %v817 = vperm.slane %v70, 4
    %v818 = vperm.slane %v70, 5
    %v819 = vperm.slane %v70, 6
    %v820 = vperm.slane %v70, 7
    %v829 = vmul.f32 %v718, %v813
    %v830 = vmul.f32 %v731, %v814
    %v831 = vmul.f32 %v744, %v815
    %v832 = vmul.f32 %v757, %v816
    %v833 = vmul.f32 %v770, %v817
    %v834 = vmul.f32 %v783, %v818
    %v835 = vmul.f32 %v796, %v819
    %v836 = vmul.f32 %v809, %v820
    %vm837 = vcmask 1043456
    %v838 = vsel %vm837, %v829, 0.0
    %v839 = vsel %vm837, %v830, 0.0
    %v840 = vadd.f32 %v838, %v839
    %v841 = vsel %vm837, %v831, 0.0
    %v842 = vadd.f32 %v840, %v841
    %v843 = vsel %vm837, %v832, 0.0
    %v844 = vadd.f32 %v842, %v843
    %v845 = vsel %vm837, %v833, 0.0
    %v846 = vadd.f32 %v844, %v845
    %v847 = vsel %vm837, %v834, 0.0
    %v848 = vadd.f32 %v846, %v847
    %v849 = vsel %vm837, %v835, 0.0
    %v850 = vadd.f32 %v848, %v849
    %v851 = vsel %vm837, %v836, 0.0
    %v852 = vadd.f32 %v850, %v851
    %853 = vadd.xlane.f32.xlu0 %v852
    %v854 = vpop.xlane.xlu0 %853
    %v855 = vrcp.pop 648.0
    %v856 = vmul.f32 648.0, %v855
    %v857 = vsub.f32 1.0, %v856
    %v858 = vmul.f32 %v855, %v857
    %v859 = vadd.f32 %v855, %v858
    %vm860 = vweird.f32 %v855
    %v861 = vsel %vm860, %v855, %v859
    %v862 = vmul.f32 %v854, %v861
    %v863 = vmul.f32 %v829, %v718
    %v864 = vmul.f32 %v830, %v731
    %v865 = vmul.f32 %v831, %v744
    %v866 = vmul.f32 %v832, %v757
    %v867 = vmul.f32 %v833, %v770
    %v868 = vmul.f32 %v834, %v783
    %v869 = vmul.f32 %v835, %v796
    %v870 = vmul.f32 %v836, %v809
    %v871 = vsel %vm837, %v863, 0.0
    %v872 = vsel %vm837, %v864, 0.0
    %v873 = vadd.f32 %v871, %v872
    %v874 = vsel %vm837, %v865, 0.0
    %v875 = vadd.f32 %v873, %v874
    %v876 = vsel %vm837, %v866, 0.0
    %v877 = vadd.f32 %v875, %v876
    %v878 = vsel %vm837, %v867, 0.0
    %v879 = vadd.f32 %v877, %v878
    %v880 = vsel %vm837, %v868, 0.0
    %v881 = vadd.f32 %v879, %v880
    %v882 = vsel %vm837, %v869, 0.0
    %v883 = vadd.f32 %v881, %v882
    %v884 = vsel %vm837, %v870, 0.0
    %v885 = vadd.f32 %v883, %v884
    %886 = vadd.xlane.f32.xlu0 %v885
    %v887 = vpop.xlane.xlu0 %886
    %v888 = vmul.f32 %v887, %v861
    %v889 = vmul.f32 %v862, %v862
    %v890 = vsub.f32 %v888, %v889
    %v891 = vmax.f32 %v890, 0.0
    %v892 = vadd.f32 %v891, 1e-05
    %v893 = vrsqrt.pop %v892
    %v894 = vmul.f32 %v893, %v892
    %v895 = vmul.f32 %v894, %v893
    %v896 = vmul.f32 0.5, %v895
    %v897 = vsub.f32 1.5, %v896
    %v898 = vmul.f32 %v893, %v897
    %vm899 = vweird.f32 %v892
    %vm900 = vweird.f32 %v893
    %vm901 = vmor %vm899, %vm900
    %v902 = vsel %vm901, %v893, %v898
    %v903 = vmul.f32 %v68, %v902
    %v904 = vmul.f32 %v862, %v903
    %906 = vrot.lane.b32.xlu0 %v904, 1
    %v907 = vpop.permute.xlu0 %906
    %v909 = vsub.f32 %v68, %v907
    %911 = vset.pattern.permute.xlu0 1
    %912 = vperm.xlu0 %911, %v903
    %v913 = vpop.permute.xlu0 %912
    %v915 = vmul.f32 %v718, %v913
    %v916 = vmul.f32 %v731, %v913
    %v917 = vmul.f32 %v744, %v913
    %v918 = vmul.f32 %v757, %v913
    %v919 = vmul.f32 %v770, %v913
    %v920 = vmul.f32 %v783, %v913
    %v921 = vmul.f32 %v796, %v913
    %v922 = vmul.f32 %v809, %v913
    %924 = vset.pattern.permute.xlu0 2
    %925 = vperm.xlu0 %924, %v909
    %v926 = vpop.permute.xlu0 %925
    %v928 = vadd.f32 %v915, %v926
    %v929 = vadd.f32 %v916, %v926
    %v930 = vadd.f32 %v917, %v926
    %v931 = vadd.f32 %v918, %v926
    %v932 = vadd.f32 %v919, %v926
    %v933 = vadd.f32 %v920, %v926
    %v934 = vadd.f32 %v921, %v926
    %v935 = vadd.f32 %v922, %v926
    %v936 = vpack.c.bf16 %v929, %v928
    %v937 = vpack.c.bf16 %v931, %v930
    %v938 = vpack.c.bf16 %v933, %v932
    %v939 = vpack.c.bf16 %v935, %v934
    %940 = vst [vmem:[#allocation4] sm:$0x33] %v936
    %941 = vst [vmem:[#allocation4 + $0x8] sm:$0x3] %v937
    %v944 = vrot.slane %v936, 6
    %v945 = vrot.slane %v937, 6
    %946 = vrot.lane.b32.xlu0 %v944, 127
    %v947 = vpop.permute.xlu0 %946
    %948 = vrot.lane.b32.xlu0 %v945, 127
    %v949 = vpop.permute.xlu0 %948
    %v950 = vrot.slane %v947, 4
    %v951 = vrot.slane %v949, 4
    %v952 = vsel %vm119, %v950, %v951
    %v953 = vsel %vm121, %v947, %v952
    %v954 = vsel %vm121, %v949, %v951
    %957 = vst [vmem:[#allocation4] sm:$0xcc] %v953
    %958 = vst [vmem:[#allocation4 + $0x8] sm:$0xc] %v954
    %959 = vrot.lane.b32.xlu0 %v936, 126
    %v960 = vpop.permute.xlu0 %959
    %961 = vrot.lane.b32.xlu0 %v937, 126
    %v962 = vpop.permute.xlu0 %961
    %v963 = vrot.slane %v960, 4
    %v964 = vrot.slane %v962, 4
    %v965 = vsel %vm119, %v963, %v964
    %v966 = vsel %vm148, %v960, %v965
    %v967 = vsel %vm148, %v962, %v964
    %970 = vst [vmem:[#allocation4 + $0x18] sm:$0x33] %v966
    %971 = vst [vmem:[#allocation4 + $0x20] sm:$0x3] %v967
    %972 = vrot.lane.b32.xlu0 %v944, 108
    %v973 = vpop.permute.xlu0 %972
    %974 = vrot.lane.b32.xlu0 %v945, 108
    %v975 = vpop.permute.xlu0 %974
    %v976 = vrot.slane %v973, 4
    %v977 = vrot.slane %v975, 4
    %v978 = vsel %vm119, %v976, %v977
    %v979 = vsel %vm176, %v973, %v978
    %v980 = vsel %vm176, %v975, %v977
    %983 = vst [vmem:[#allocation4 + $0x18] sm:$0xcc] %v979
    %984 = vst [vmem:[#allocation4 + $0x20] sm:$0xc] %v980
    %985 = vrot.lane.b32.xlu0 %v936, 107
    %v986 = vpop.permute.xlu0 %985
    %987 = vrot.lane.b32.xlu0 %v937, 107
    %v988 = vpop.permute.xlu0 %987
    %v989 = vrot.slane %v986, 4
    %v990 = vrot.slane %v988, 4
    %v991 = vsel %vm119, %v989, %v990
    %v992 = vsel %vm203, %v986, %v991
    %v993 = vsel %vm203, %v988, %v990
    %996 = vst [vmem:[#allocation4 + $0x30] sm:$0x33] %v992
    %997 = vst [vmem:[#allocation4 + $0x38] sm:$0x3] %v993
    %998 = vrot.lane.b32.xlu0 %v944, 106
    %v999 = vpop.permute.xlu0 %998
    %1000 = vrot.lane.b32.xlu0 %v945, 106
    %v1001 = vpop.permute.xlu0 %1000
    %v1002 = vrot.slane %v999, 4
    %v1003 = vrot.slane %v1001, 4
    %v1004 = vsel %vm119, %v1002, %v1003
    %v1005 = vsel %vm231, %v999, %v1004
    %v1006 = vsel %vm231, %v1001, %v1003
    %1009 = vst [vmem:[#allocation4 + $0x30] sm:$0xcc] %v1005
    %1010 = vst [vmem:[#allocation4 + $0x38] sm:$0xc] %v1006
    %1011 = vrot.lane.b32.xlu0 %v936, 88
    %v1012 = vpop.permute.xlu0 %1011
    %1013 = vrot.lane.b32.xlu0 %v937, 88
    %v1014 = vpop.permute.xlu0 %1013
    %v1015 = vrot.slane %v1012, 4
    %v1016 = vrot.slane %v1014, 4
    %v1017 = vsel %vm119, %v1015, %v1016
    %v1018 = vsel %vm258, %v1012, %v1017
    %v1019 = vsel %vm258, %v1014, %v1016
    %1022 = vst [vmem:[#allocation4 + $0x48] sm:$0x33] %v1018
    %1023 = vst [vmem:[#allocation4 + $0x50] sm:$0x3] %v1019
    %1024 = vrot.lane.b32.xlu0 %v944, 87
    %v1025 = vpop.permute.xlu0 %1024
    %1026 = vrot.lane.b32.xlu0 %v945, 87
    %v1027 = vpop.permute.xlu0 %1026
    %v1028 = vrot.slane %v1025, 4
    %v1029 = vrot.slane %v1027, 4
    %v1030 = vsel %vm119, %v1028, %v1029
    %v1031 = vsel %vm286, %v1025, %v1030
    %v1032 = vsel %vm286, %v1027, %v1029
    %1035 = vst [vmem:[#allocation4 + $0x48] sm:$0xcc] %v1031
    %1036 = vst [vmem:[#allocation4 + $0x50] sm:$0xc] %v1032
    %1037 = vrot.lane.b32.xlu0 %v936, 86
    %v1038 = vpop.permute.xlu0 %1037
    %1039 = vrot.lane.b32.xlu0 %v937, 86
    %v1040 = vpop.permute.xlu0 %1039
    %v1041 = vrot.slane %v1038, 4
    %v1042 = vrot.slane %v1040, 4
    %v1043 = vsel %vm119, %v1041, %v1042
    %v1044 = vsel %vm313, %v1038, %v1043
    %v1045 = vsel %vm313, %v1040, %v1042
    %1048 = vst [vmem:[#allocation4 + $0x60] sm:$0x33] %v1044
    %1049 = vst [vmem:[#allocation4 + $0x68] sm:$0x3] %v1045
    %1050 = vst [vmem:[#allocation4 + $0xc] sm:$0x33] %v938
    %1051 = vst [vmem:[#allocation4 + $0x14] sm:$0x3] %v939
    %v1054 = vrot.slane %v938, 6
    %v1055 = vrot.slane %v939, 6
    %1056 = vrot.lane.b32.xlu0 %v1054, 127
    %v1057 = vpop.permute.xlu0 %1056
    %1058 = vrot.lane.b32.xlu0 %v1055, 127
    %v1059 = vpop.permute.xlu0 %1058
    %v1060 = vrot.slane %v1057, 4
    %v1061 = vrot.slane %v1059, 4
    %v1062 = vsel %vm119, %v1060, %v1061
    %v1063 = vsel %vm121, %v1057, %v1062
    %v1064 = vsel %vm121, %v1059, %v1061
    %1067 = vst [vmem:[#allocation4 + $0xc] sm:$0xcc] %v1063
    %1068 = vst [vmem:[#allocation4 + $0x14] sm:$0xc] %v1064
    %1069 = vrot.lane.b32.xlu0 %v938, 126
    %v1070 = vpop.permute.xlu0 %1069
    %1071 = vrot.lane.b32.xlu0 %v939, 126
    %v1072 = vpop.permute.xlu0 %1071
    %v1073 = vrot.slane %v1070, 4
    %v1074 = vrot.slane %v1072, 4
    %v1075 = vsel %vm119, %v1073, %v1074
    %v1076 = vsel %vm148, %v1070, %v1075
    %v1077 = vsel %vm148, %v1072, %v1074
    %1080 = vst [vmem:[#allocation4 + $0x24] sm:$0x33] %v1076
    %1081 = vst [vmem:[#allocation4 + $0x2c] sm:$0x3] %v1077
    %1082 = vrot.lane.b32.xlu0 %v1054, 108
    %v1083 = vpop.permute.xlu0 %1082
    %1084 = vrot.lane.b32.xlu0 %v1055, 108
    %v1085 = vpop.permute.xlu0 %1084
    %v1086 = vrot.slane %v1083, 4
    %v1087 = vrot.slane %v1085, 4
    %v1088 = vsel %vm119, %v1086, %v1087
    %v1089 = vsel %vm176, %v1083, %v1088
    %v1090 = vsel %vm176, %v1085, %v1087
    %1093 = vst [vmem:[#allocation4 + $0x24] sm:$0xcc] %v1089
    %1094 = vst [vmem:[#allocation4 + $0x2c] sm:$0xc] %v1090
    %1095 = vrot.lane.b32.xlu0 %v938, 107
    %v1096 = vpop.permute.xlu0 %1095
    %1097 = vrot.lane.b32.xlu0 %v939, 107
    %v1098 = vpop.permute.xlu0 %1097
    %v1099 = vrot.slane %v1096, 4
    %v1100 = vrot.slane %v1098, 4
    %v1101 = vsel %vm119, %v1099, %v1100
    %v1102 = vsel %vm203, %v1096, %v1101
    %v1103 = vsel %vm203, %v1098, %v1100
    %1106 = vst [vmem:[#allocation4 + $0x3c] sm:$0x33] %v1102
    %1107 = vst [vmem:[#allocation4 + $0x44] sm:$0x3] %v1103
    %1108 = vrot.lane.b32.xlu0 %v1054, 106
    %v1109 = vpop.permute.xlu0 %1108
    %1110 = vrot.lane.b32.xlu0 %v1055, 106
    %v1111 = vpop.permute.xlu0 %1110
    %v1112 = vrot.slane %v1109, 4
    %v1113 = vrot.slane %v1111, 4
    %v1114 = vsel %vm119, %v1112, %v1113
    %v1115 = vsel %vm231, %v1109, %v1114
    %v1116 = vsel %vm231, %v1111, %v1113
    %1119 = vst [vmem:[#allocation4 + $0x3c] sm:$0xcc] %v1115
    %1120 = vst [vmem:[#allocation4 + $0x44] sm:$0xc] %v1116
    %1121 = vrot.lane.b32.xlu0 %v938, 88
    %v1122 = vpop.permute.xlu0 %1121
    %1123 = vrot.lane.b32.xlu0 %v939, 88
    %v1124 = vpop.permute.xlu0 %1123
    %v1125 = vrot.slane %v1122, 4
    %v1126 = vrot.slane %v1124, 4
    %v1127 = vsel %vm119, %v1125, %v1126
    %v1128 = vsel %vm258, %v1122, %v1127
    %v1129 = vsel %vm258, %v1124, %v1126
    %1132 = vst [vmem:[#allocation4 + $0x54] sm:$0x33] %v1128
    %1133 = vst [vmem:[#allocation4 + $0x5c] sm:$0x3] %v1129
    %1134 = vrot.lane.b32.xlu0 %v1054, 87
    %v1135 = vpop.permute.xlu0 %1134
    %1136 = vrot.lane.b32.xlu0 %v1055, 87
    %v1137 = vpop.permute.xlu0 %1136
    %v1138 = vrot.slane %v1135, 4
    %v1139 = vrot.slane %v1137, 4
    %v1140 = vsel %vm119, %v1138, %v1139
    %v1141 = vsel %vm286, %v1135, %v1140
    %v1142 = vsel %vm286, %v1137, %v1139
    %1145 = vst [vmem:[#allocation4 + $0x54] sm:$0xcc] %v1141
    %1146 = vst [vmem:[#allocation4 + $0x5c] sm:$0xc] %v1142
    %1147 = vrot.lane.b32.xlu0 %v938, 86
    %v1148 = vpop.permute.xlu0 %1147
    %1149 = vrot.lane.b32.xlu0 %v939, 86
    %v1150 = vpop.permute.xlu0 %1149
    %v1151 = vrot.slane %v1148, 4
    %v1152 = vrot.slane %v1150, 4
    %v1153 = vsel %vm119, %v1151, %v1152
    %v1154 = vsel %vm313, %v1148, %v1153
    %v1155 = vsel %vm313, %v1150, %v1152
    %1158 = vst [vmem:[#allocation4 + $0x6c] sm:$0x33] %v1154
    %1159 = vst [vmem:[#allocation4 + $0x74] sm:$0x3] %v1155
    %v1160 = vld [vmem:[%s2] sm:$0xf]
    %v1161 = vld [vmem:[#allocation4] sm:$0xff]
    %v1162 = vld [vmem:[#allocation4 + $0x8] sm:$0xff]
    %v1163 = vld [vmem:[#allocation4 + $0x10] sm:$0xff]
    %v1164 = vld [vmem:[#allocation4 + $0x18] sm:$0xff]
    %v1165 = vld [vmem:[#allocation4 + $0x20] sm:$0xff]
    %v1166 = vld [vmem:[#allocation4 + $0x28] sm:$0xff]
    %v1167 = vld [vmem:[#allocation4 + $0x30] sm:$0xff]
    %v1168 = vld [vmem:[#allocation4 + $0x38] sm:$0xff]
    %v1169 = vld [vmem:[#allocation4 + $0x40] sm:$0xff]
    %v1170 = vld [vmem:[#allocation4 + $0x48] sm:$0xff]
    %v1171 = vld [vmem:[#allocation4 + $0x50] sm:$0xff]
    %v1172 = vld [vmem:[#allocation4 + $0x58] sm:$0xff]
    %v1173 = vld [vmem:[#allocation4 + $0x60] sm:$0x33]
    %v1174 = vld [vmem:[#allocation4 + $0x68] sm:$0x33]
    %v1175 = vld [vmem:[#allocation4 + $0x70] sm:$0x33]
    %1177 = vset.pattern.permute.xlu0 3
    %1178 = vperm.xlu0 %1177, %v69
    %v1179 = vpop.permute.xlu0 %1178
    %v1196 = vunpack.c.l.b16 %v1161
    %v1197 = vunpack.c.h.b16 %v1161
    %v1198 = vunpack.c.l.b16 %v1162
    %v1199 = vunpack.c.h.b16 %v1162
    %v1200 = vunpack.c.l.b16 %v1163
    %v1201 = vunpack.c.h.b16 %v1163
    %v1202 = vunpack.c.l.b16 %v1164
    %v1203 = vunpack.c.h.b16 %v1164
    %v1204 = vunpack.c.l.b16 %v1165
    %v1205 = vunpack.c.h.b16 %v1165
    %v1206 = vunpack.c.l.b16 %v1166
    %v1207 = vunpack.c.h.b16 %v1166
    %v1208 = vunpack.c.l.b16 %v1167
    %v1209 = vunpack.c.h.b16 %v1167
    %v1210 = vunpack.c.l.b16 %v1168
    %v1211 = vunpack.c.h.b16 %v1168
    %v1212 = vunpack.c.l.b16 %v1169
    %v1213 = vunpack.c.h.b16 %v1169
    %v1214 = vunpack.c.l.b16 %v1170
    %v1215 = vunpack.c.h.b16 %v1170
    %v1216 = vunpack.c.l.b16 %v1171
    %v1217 = vunpack.c.h.b16 %v1171
    %v1218 = vunpack.c.l.b16 %v1172
    %v1219 = vunpack.c.h.b16 %v1172
    %v1220 = vunpack.c.l.b16 %v1173
    %v1221 = vunpack.c.h.b16 %v1173
    %v1222 = vunpack.c.l.b16 %v1174
    %v1223 = vunpack.c.h.b16 %v1174
    %v1224 = vunpack.c.l.b16 %v1175
    %v1225 = vunpack.c.h.b16 %v1175
    %v1226 = vpack.c.b16 %v1202, %v1196
    %v1227 = vpack.c.b16 %v1203, %v1197
    %v1228 = vpack.c.b16 %v1204, %v1198
    %v1229 = vpack.c.b16 %v1205, %v1199
    %v1230 = vpack.c.b16 %v1206, %v1200
    %v1231 = vpack.c.b16 %v1207, %v1201
    %v1232 = vpack.c.b16 %v1214, %v1208
    %v1233 = vpack.c.b16 %v1215, %v1209
    %v1234 = vpack.c.b16 %v1216, %v1210
    %v1235 = vpack.c.b16 %v1217, %v1211
    %v1236 = vpack.c.b16 %v1218, %v1212
    %v1237 = vpack.c.b16 %v1219, %v1213
    %v1238 = vpack.c.b16 %v1220, %v1220
    %v1239 = vpack.c.b16 %v1221, %v1221
    %v1240 = vpack.c.b16 %v1222, %v1222
    %v1241 = vpack.c.b16 %v1223, %v1223
    %v1242 = vpack.c.b16 %v1224, %v1224
    %v1243 = vpack.c.b16 %v1225, %v1225
    %v1257 = vsel %vm679, %v1160, 0
    %v1260 = vsel %vm683, %v1238, 0
    %v1263 = vsel %vm683, %v1239, 0
    %v1266 = vsel %vm683, %v1240, 0
    %v1269 = vsel %vm683, %v1241, 0
    %v1272 = vsel %vm683, %v1242, 0
    %v1275 = vsel %vm683, %v1243, 0
    %1277 = vmatpush.bf16.msra.mxu0 0
    %1278 = vmatpush.bf16.msra.mxu0 0
    %1279 = vmatpush.bf16.msra.mxu0 0
    %1280 = vmatpush.bf16.msra.mxu0 0
    %1281 = vmatpush.bf16.msra.mxu0 0
    %1282 = vmatpush.bf16.msra.mxu0 %v1260
    %1283 = vmatpush.bf16.msra.mxu0 %v1232
    %1284 = vmatpush.bf16.msra.mxu0 %v1226
    %1285 = vmatmul.bf16.gmra.mxu0 %v1257
    %v1286 = vpop.f32.mrf.mxu0
    %v1287 = vadd.f32 %v1179, %v1286
    %v1288 = vpop.f32.mrf.mxu0
    %1289 = vdwg.mxu0
    %1290 = vmatpush.bf16.msra.mxu0 0
    %1291 = vmatpush.bf16.msra.mxu0 0
    %1292 = vmatpush.bf16.msra.mxu0 0
    %1293 = vmatpush.bf16.msra.mxu0 0
    %1294 = vmatpush.bf16.msra.mxu0 0
    %1295 = vmatpush.bf16.msra.mxu0 %v1263
    %1296 = vmatpush.bf16.msra.mxu0 %v1233
    %1297 = vmatpush.bf16.msra.mxu0 %v1227
    %1298 = vmatmul.bf16.gmra.mxu0 %v1257
    %v1299 = vpop.f32.mrf.mxu0
    %v1300 = vadd.f32 %v1179, %v1299
    %v1301 = vpop.f32.mrf.mxu0
    %1302 = vdwg.mxu0
    %1303 = vmatpush.bf16.msra.mxu0 0
    %1304 = vmatpush.bf16.msra.mxu0 0
    %1305 = vmatpush.bf16.msra.mxu0 0
    %1306 = vmatpush.bf16.msra.mxu0 0
    %1307 = vmatpush.bf16.msra.mxu0 0
    %1308 = vmatpush.bf16.msra.mxu0 %v1266
    %1309 = vmatpush.bf16.msra.mxu0 %v1234
    %1310 = vmatpush.bf16.msra.mxu0 %v1228
    %1311 = vmatmul.bf16.gmra.mxu0 %v1257
    %v1312 = vpop.f32.mrf.mxu0
    %v1313 = vadd.f32 %v1179, %v1312
    %v1314 = vpop.f32.mrf.mxu0
    %1315 = vdwg.mxu0
    %1316 = vmatpush.bf16.msra.mxu0 0
    %1317 = vmatpush.bf16.msra.mxu0 0
    %1318 = vmatpush.bf16.msra.mxu0 0
    %1319 = vmatpush.bf16.msra.mxu0 0
    %1320 = vmatpush.bf16.msra.mxu0 0
    %1321 = vmatpush.bf16.msra.mxu0 %v1269
    %1322 = vmatpush.bf16.msra.mxu0 %v1235
    %1323 = vmatpush.bf16.msra.mxu0 %v1229
    %1324 = vmatmul.bf16.gmra.mxu0 %v1257
    %v1325 = vpop.f32.mrf.mxu0
    %v1326 = vadd.f32 %v1179, %v1325
    %v1327 = vpop.f32.mrf.mxu0
    %1328 = vdwg.mxu0
    %1329 = vmatpush.bf16.msra.mxu0 0
    %1330 = vmatpush.bf16.msra.mxu0 0
    %1331 = vmatpush.bf16.msra.mxu0 0
    %1332 = vmatpush.bf16.msra.mxu0 0
    %1333 = vmatpush.bf16.msra.mxu0 0
    %1334 = vmatpush.bf16.msra.mxu0 %v1272
    %1335 = vmatpush.bf16.msra.mxu0 %v1236
    %1336 = vmatpush.bf16.msra.mxu0 %v1230
    %1337 = vmatmul.bf16.gmra.mxu0 %v1257
    %v1338 = vpop.f32.mrf.mxu0
    %v1339 = vadd.f32 %v1179, %v1338
    %v1340 = vpop.f32.mrf.mxu0
    %1341 = vdwg.mxu0
    %1342 = vmatpush.bf16.msra.mxu0 0
    %1343 = vmatpush.bf16.msra.mxu0 0
    %1344 = vmatpush.bf16.msra.mxu0 0
    %1345 = vmatpush.bf16.msra.mxu0 0
    %1346 = vmatpush.bf16.msra.mxu0 0
    %1347 = vmatpush.bf16.msra.mxu0 %v1275
    %1348 = vmatpush.bf16.msra.mxu0 %v1237
    %1349 = vmatpush.bf16.msra.mxu0 %v1231
    %1350 = vmatmul.bf16.gmra.mxu0 %v1257
    %v1351 = vpop.f32.mrf.mxu0
    %v1352 = vadd.f32 %v1179, %v1351
    %v1353 = vpop.f32.mrf.mxu0
    %1354 = vdwg.mxu0
    %v1356 = vperm.slane %v72, 0
    %v1357 = vperm.slane %v72, 1
    %v1358 = vperm.slane %v72, 2
    %v1359 = vperm.slane %v72, 3
    %v1360 = vperm.slane %v72, 4
    %v1361 = vperm.slane %v72, 5
    %v1368 = vmul.f32 %v1287, %v1356
    %v1369 = vmul.f32 %v1300, %v1357
    %v1370 = vmul.f32 %v1313, %v1358
    %v1371 = vmul.f32 %v1326, %v1359
    %v1372 = vmul.f32 %v1339, %v1360
    %v1373 = vmul.f32 %v1352, %v1361
    %v1374 = vadd.f32 %v1368, %v1369
    %v1375 = vadd.f32 %v1374, %v1370
    %v1376 = vadd.f32 %v1375, %v1371
    %v1377 = vadd.f32 %v1376, %v1372
    %v1378 = vadd.f32 %v1377, %v1373
    %1379 = vadd.xlane.f32.xlu0 %v1378
    %v1380 = vpop.xlane.xlu0 %1379
    %v1381 = vrcp.pop 512.0
    %v1382 = vmul.f32 512.0, %v1381
    %v1383 = vsub.f32 1.0, %v1382
    %v1384 = vmul.f32 %v1381, %v1383
    %v1385 = vadd.f32 %v1381, %v1384
    %vm1386 = vweird.f32 %v1381
    %v1387 = vsel %vm1386, %v1381, %v1385
    %v1388 = vmul.f32 %v1380, %v1387
    %v1389 = vmul.f32 %v1368, %v1287
    %v1390 = vmul.f32 %v1369, %v1300
    %v1391 = vmul.f32 %v1370, %v1313
    %v1392 = vmul.f32 %v1371, %v1326
    %v1393 = vmul.f32 %v1372, %v1339
    %v1394 = vmul.f32 %v1373, %v1352
    %v1395 = vadd.f32 %v1389, %v1390
    %v1396 = vadd.f32 %v1395, %v1391
    %v1397 = vadd.f32 %v1396, %v1392
    %v1398 = vadd.f32 %v1397, %v1393
    %v1399 = vadd.f32 %v1398, %v1394
    %1400 = vadd.xlane.f32.xlu0 %v1399
    %v1401 = vpop.xlane.xlu0 %1400
    %v1402 = vmul.f32 %v1401, %v1387
    %v1403 = vmul.f32 %v1388, %v1388
    %v1404 = vsub.f32 %v1402, %v1403
    %v1405 = vmax.f32 %v1404, 0.0
    %v1406 = vadd.f32 %v1405, 1e-05
    %v1407 = vrsqrt.pop %v1406
    %v1408 = vmul.f32 %v1407, %v1406
    %v1409 = vmul.f32 %v1408, %v1407
    %v1410 = vmul.f32 0.5, %v1409
    %v1411 = vsub.f32 1.5, %v1410
    %v1412 = vmul.f32 %v1407, %v1411
    %vm1413 = vweird.f32 %v1406
    %vm1414 = vweird.f32 %v1407
    %vm1415 = vmor %vm1413, %vm1414
    %v1416 = vsel %vm1415, %v1407, %v1412
    %v1417 = vmul.f32 %v69, %v1416
    %v1418 = vmul.f32 %v1388, %v1417
    %1420 = vrot.lane.b32.xlu0 %v1418, 1
    %v1421 = vpop.permute.xlu0 %1420
    %v1423 = vsub.f32 %v69, %v1421
    %1425 = vset.pattern.permute.xlu0 4
    %1426 = vperm.xlu0 %1425, %v1417
    %v1427 = vpop.permute.xlu0 %1426
    %v1429 = vmul.f32 %v1287, %v1427
    %v1430 = vmul.f32 %v1300, %v1427
    %v1431 = vmul.f32 %v1313, %v1427
    %v1432 = vmul.f32 %v1326, %v1427
    %v1433 = vmul.f32 %v1339, %v1427
    %v1434 = vmul.f32 %v1352, %v1427
    %1436 = vset.pattern.permute.xlu0 5
    %1437 = vperm.xlu0 %1436, %v1423
    %v1438 = vpop.permute.xlu0 %1437
    %v1440 = vadd.f32 %v1429, %v1438
    %v1441 = vadd.f32 %v1430, %v1438
    %v1442 = vadd.f32 %v1431, %v1438
    %v1443 = vadd.f32 %v1432, %v1438
    %v1444 = vadd.f32 %v1433, %v1438
    %v1445 = vadd.f32 %v1434, %v1438
    %v1446 = vmul.f32 %v1440, 0.01
    %v1447 = vmul.f32 %v1441, 0.01
    %v1448 = vmul.f32 %v1442, 0.01
    %v1449 = vmul.f32 %v1443, 0.01
    %v1450 = vmul.f32 %v1444, 0.01
    %v1451 = vmul.f32 %v1445, 0.01
    %v1452 = vmax.f32 %v1440, %v1446
    %v1453 = vmax.f32 %v1441, %v1447
    %v1454 = vmax.f32 %v1442, %v1448
    %v1455 = vmax.f32 %v1443, %v1449
    %v1456 = vmax.f32 %v1444, %v1450
    %v1457 = vmax.f32 %v1445, %v1451
    %v1458 = vld [vmem:[%s3] sm:$0xf]
    %1459 = vset.pattern.permute.xlu0 6
    %1460 = vperm.xlu0 %1459, %v69
    %v1461 = vpop.permute.xlu0 %1460
    %vm1463 = vcmask 31744
    %v1465 = vsel %vm1463, %v1458, 0
    %1467 = vmatpush.bf16.msra.mxu0 0
    %1468 = vmatpush.bf16.msra.mxu0 0
    %1469 = vmatpush.bf16.msra.mxu0 0
    %1470 = vmatpush.bf16.msra.mxu0 0
    %1471 = vmatpush.bf16.msra.mxu0 0
    %1472 = vmatpush.bf16.msra.mxu0 0
    %1473 = vmatpush.bf16.msra.mxu0 0
    %1474 = vmatpush.bf16.msra.mxu0 %v685
    %1475 = vmatmul.bf16.gmra.mxu0 %v1465
    %v1476 = vpop.f32.mrf.mxu0
    %v1477 = vadd.f32 %v1461, %v1476
    %v1478 = vpop.f32.mrf.mxu0
    %1479 = vdwg.mxu0
    %1480 = vmatpush.bf16.msra.mxu0 0
    %1481 = vmatpush.bf16.msra.mxu0 0
    %1482 = vmatpush.bf16.msra.mxu0 0
    %1483 = vmatpush.bf16.msra.mxu0 0
    %1484 = vmatpush.bf16.msra.mxu0 0
    %1485 = vmatpush.bf16.msra.mxu0 0
    %1486 = vmatpush.bf16.msra.mxu0 0
    %1487 = vmatpush.bf16.msra.mxu0 %v688
    %1488 = vmatmul.bf16.gmra.mxu0 %v1465
    %v1489 = vpop.f32.mrf.mxu0
    %v1490 = vadd.f32 %v1461, %v1489
    %v1491 = vpop.f32.mrf.mxu0
    %1492 = vdwg.mxu0
    %1493 = vmatpush.bf16.msra.mxu0 0
    %1494 = vmatpush.bf16.msra.mxu0 0
    %1495 = vmatpush.bf16.msra.mxu0 0
    %1496 = vmatpush.bf16.msra.mxu0 0
    %1497 = vmatpush.bf16.msra.mxu0 0
    %1498 = vmatpush.bf16.msra.mxu0 0
    %1499 = vmatpush.bf16.msra.mxu0 0
    %1500 = vmatpush.bf16.msra.mxu0 %v691
    %1501 = vmatmul.bf16.gmra.mxu0 %v1465
    %v1502 = vpop.f32.mrf.mxu0
    %v1503 = vadd.f32 %v1461, %v1502
    %v1504 = vpop.f32.mrf.mxu0
    %1505 = vdwg.mxu0
    %1506 = vmatpush.bf16.msra.mxu0 0
    %1507 = vmatpush.bf16.msra.mxu0 0
    %1508 = vmatpush.bf16.msra.mxu0 0
    %1509 = vmatpush.bf16.msra.mxu0 0
    %1510 = vmatpush.bf16.msra.mxu0 0
    %1511 = vmatpush.bf16.msra.mxu0 0
    %1512 = vmatpush.bf16.msra.mxu0 0
    %1513 = vmatpush.bf16.msra.mxu0 %v697
    %1514 = vmatmul.bf16.gmra.mxu0 %v1465
    %v1515 = vpop.f32.mrf.mxu0
    %v1516 = vadd.f32 %v1461, %v1515
    %v1517 = vpop.f32.mrf.mxu0
    %1518 = vdwg.mxu0
    %1519 = vmatpush.bf16.msra.mxu0 0
    %1520 = vmatpush.bf16.msra.mxu0 0
    %1521 = vmatpush.bf16.msra.mxu0 0
    %1522 = vmatpush.bf16.msra.mxu0 0
    %1523 = vmatpush.bf16.msra.mxu0 0
    %1524 = vmatpush.bf16.msra.mxu0 0
    %1525 = vmatpush.bf16.msra.mxu0 0
    %1526 = vmatpush.bf16.msra.mxu0 %v700
    %1527 = vmatmul.bf16.gmra.mxu0 %v1465
    %v1528 = vpop.f32.mrf.mxu0
    %v1529 = vadd.f32 %v1461, %v1528
    %v1530 = vpop.f32.mrf.mxu0
    %1531 = vdwg.mxu0
    %1532 = vmatpush.bf16.msra.mxu0 0
    %1533 = vmatpush.bf16.msra.mxu0 0
    %1534 = vmatpush.bf16.msra.mxu0 0
    %1535 = vmatpush.bf16.msra.mxu0 0
    %1536 = vmatpush.bf16.msra.mxu0 0
    %1537 = vmatpush.bf16.msra.mxu0 0
    %1538 = vmatpush.bf16.msra.mxu0 0
    %1539 = vmatpush.bf16.msra.mxu0 %v703
    %1540 = vmatmul.bf16.gmra.mxu0 %v1465
    %v1541 = vpop.f32.mrf.mxu0
    %v1542 = vadd.f32 %v1461, %v1541
    %v1543 = vpop.f32.mrf.mxu0
    %1544 = vdwg.mxu0
    %v1545 = vadd.f32 %v1452, %v1477
    %v1546 = vadd.f32 %v1453, %v1490
    %v1547 = vadd.f32 %v1454, %v1503
    %1548 = vst [vmem:[#allocation11] sm:$0xff] %v1545
    %1549 = vst [vmem:[#allocation11 + $0x8] sm:$0xff] %v1546
    %1550 = vst [vmem:[#allocation11 + $0x10] sm:$0xff] %v1547
    %v1551 = vadd.f32 %v1455, %v1516
    %v1552 = vadd.f32 %v1456, %v1529
    %v1553 = vadd.f32 %v1457, %v1542
    %s1554 = scalar_lea.vmem [#allocation11], 24
    %1555 = vst [vmem:[%s1554] sm:$0xff] %v1551
    %1556 = vst [vmem:[%s1554 + $0x8] sm:$0xff] %v1552
    %1557 = vst [vmem:[%s1554 + $0x10] sm:$0xff] %v1553
    // Predicated region
    $region38: #{tpu_custom_call.1} parent=1 // pred_check
      _
    $region39: #{tpu_custom_call.1} parent=1 // pred_check_branch
      %1559 = sbr.rel (0) target = $region41
    $region40: #{tpu_custom_call.1} parent=1 // pred_region
      %1561 = vsyncadd [#allocation7], 0
      %s1562 = sshll.u32 [#allocation11], 4
      %s1563 = int_to_ptr.vmem [resolvable:$true] %s1562
      %s1564 = sshll.u32 %s6, 4
      %s1565 = int_to_ptr.hbm [resolvable:$true] %s1564
      %1570 = dma.vmem_to_hbm [thread:$0]  %s1563, 768, %s1565, [#allocation7], 384, 384, 24
    $region41: #{tpu_custom_call.1} parent=1 // pred_fallthru
      _
    // Predicated region
    $region42: #{tpu_custom_call.1} parent=1 // pred_check
      _
    $region43: #{tpu_custom_call.1} parent=1 // pred_check_branch
      %1572 = sbr.rel (0) target = $region45
    $region44: #{tpu_custom_call.1} parent=1 // pred_region
      %1574 = dma.done [#allocation7], 768
    $region45: #{tpu_custom_call.1} parent=1 // pred_fallthru
      _
    %1575 = vsyncpa [#allocation6], 1
    %1576 = vsyncpa [#allocation9], 1
    %1577 = vsyncpa [#allocation7], 1

</llo_original>
